<compile_context>
chip_gen: v6e
topology: v6e:2x2x1
jax: 0.10.0
libtpu: 0.0.40
codegen_flags: <defaults>
</compile_context>

<pallas_src>
import jax
import jax.numpy as jnp
from jax import lax
from jax.experimental import pallas as pl
from jax.experimental.pallas import tpu as pltpu

EPS = 1e-5
_VMEM_LIMIT = 32 * 1024 * 1024  # modest scoped-VMEM raise; actual usage here is < 1 MiB


# --------------------------------------------------------------------------- #
# Kernel bodies
# --------------------------------------------------------------------------- #
def _pool_conv1_kernel(x_ref, w_ref, b_ref, z_ref, pbuf):
    """MaxPool3d(2) + depth-zero-pad + 3x3x3 conv1 + bias for one batch element.

    x_ref: (1, 8, D, H*W*Cin)      raw input; axis 1 enumerates the (dz, hy, wx) window
    w_ref: (3, H*W*Cin, H*W*Cout)  2-D (H,W) block-Toeplitz weights, indexed by kz
    b_ref: (1, H*W*Cout)           (H*W)-tiled bias
    z_ref: (1, D, H*W*Cout)        conv1 + bias
    pbuf : (D+2, H*W*Cin)          VMEM scratch: depth-padded pooled activation
    """
    D = z_ref.shape[1]
    K = pbuf.shape[1]

    # 2x2x2 max-pool: 8-way max over the window-offset axis (each load is (D, H*W*Cin)).
    m = x_ref[0, 0, :, :]
    for j in range(1, 8):
        m = jnp.maximum(m, x_ref[0, j, :, :])

    # Depth-padded activation: only the 2 halo rows are zeroed (no full-block zero store).
    pbuf[0:1, :] = jnp.zeros((1, K), jnp.float32)
    pbuf[D + 1:D + 2, :] = jnp.zeros((1, K), jnp.float32)
    pbuf[1:D + 1, :] = m

    # 3x3x3 conv == 3 matmuls against the (H,W)-Toeplitz weight (kz = depth tap).
    acc = jnp.dot(pbuf[0:D, :], w_ref[0], preferred_element_type=jnp.float32)
    acc = acc + jnp.dot(pbuf[1:D + 1, :], w_ref[1], preferred_element_type=jnp.float32)
    acc = acc + jnp.dot(pbuf[2:D + 2, :], w_ref[2], preferred_element_type=jnp.float32)
    z_ref[0] = acc + b_ref[...]


def _bn_relu_conv2_kernel(z1_ref, s_ref, t_ref, w_ref, b_ref, z2_ref, ybuf):
    """Folded-BN1 + ReLU + depth-zero-pad + 3x3x3 conv2 + bias for one batch element.

    z1_ref: (1, D, H*W*Cout); s_ref/t_ref/b_ref: (1, H*W*Cout)
    w_ref:  (3, H*W*Cout, H*W*Cout); z2_ref: (1, D, H*W*Cout); ybuf: (D+2, H*W*Cout)
    """
    D = z2_ref.shape[1]
    K = ybuf.shape[1]

    y = jnp.maximum(z1_ref[0] * s_ref[...] + t_ref[...], 0.0)            # (D, H*W*Cout)

    ybuf[0:1, :] = jnp.zeros((1, K), jnp.float32)
    ybuf[D + 1:D + 2, :] = jnp.zeros((1, K), jnp.float32)
    ybuf[1:D + 1, :] = y

    acc = jnp.dot(ybuf[0:D, :], w_ref[0], preferred_element_type=jnp.float32)
    acc = acc + jnp.dot(ybuf[1:D + 1, :], w_ref[1], preferred_element_type=jnp.float32)
    acc = acc + jnp.dot(ybuf[2:D + 2, :], w_ref[2], preferred_element_type=jnp.float32)
    z2_ref[0] = acc + b_ref[...]


def _bn_relu_kernel(z_ref, s_ref, t_ref, o_ref):
    """Folded-BN2 + ReLU (lane-dense elementwise)."""
    o_ref[...] = jnp.maximum(z_ref[...] * s_ref[...] + t_ref[...], 0.0)


# --------------------------------------------------------------------------- #
# pallas_call wrappers
# --------------------------------------------------------------------------- #
def _cparams():
    return pltpu.CompilerParams(dimension_semantics=("parallel",),
                                vmem_limit_bytes=_VMEM_LIMIT)


def _pool_conv1(x8, wt1, b1t):
    N, _, D, Kin = x8.shape
    KC = wt1.shape[2]
    return pl.pallas_call(
        _pool_conv1_kernel,
        out_shape=jax.ShapeDtypeStruct((N, D, KC), jnp.float32),
        grid=(N,),
        in_specs=[pl.BlockSpec((1, 8, D, Kin), lambda n: (n, 0, 0, 0)),
                  pl.BlockSpec((3, Kin, KC), lambda n: (0, 0, 0)),      # weights resident
                  pl.BlockSpec((1, KC), lambda n: (0, 0))],             # bias resident
        out_specs=pl.BlockSpec((1, D, KC), lambda n: (n, 0, 0)),
        scratch_shapes=[pltpu.VMEM((D + 2, Kin), jnp.float32)],
        compiler_params=_cparams(),
    )(x8, wt1, b1t)


def _bn_relu_conv2(z1, s1, t1, wt2, b2t):
    N, D, KC = z1.shape
    return pl.pallas_call(
        _bn_relu_conv2_kernel,
        out_shape=jax.ShapeDtypeStruct((N, D, KC), jnp.float32),
        grid=(N,),
        in_specs=[pl.BlockSpec((1, D, KC), lambda n: (n, 0, 0)),
                  pl.BlockSpec((1, KC), lambda n: (0, 0)),
                  pl.BlockSpec((1, KC), lambda n: (0, 0)),
                  pl.BlockSpec((3, KC, KC), lambda n: (0, 0, 0)),       # weights resident
                  pl.BlockSpec((1, KC), lambda n: (0, 0))],
        out_specs=pl.BlockSpec((1, D, KC), lambda n: (n, 0, 0)),
        scratch_shapes=[pltpu.VMEM((D + 2, KC), jnp.float32)],
        compiler_params=_cparams(),
    )(z1, s1, t1, wt2, b2t)


def _bn_relu(z2, s2, t2):
    N, D, KC = z2.shape
    return pl.pallas_call(
        _bn_relu_kernel,
        out_shape=jax.ShapeDtypeStruct((N, D, KC), jnp.float32),
        grid=(N,),
        in_specs=[pl.BlockSpec((1, D, KC), lambda n: (n, 0, 0)),
                  pl.BlockSpec((1, KC), lambda n: (0, 0)),
                  pl.BlockSpec((1, KC), lambda n: (0, 0))],
        out_specs=pl.BlockSpec((1, D, KC), lambda n: (n, 0, 0)),
        compiler_params=_cparams(),
    )(z2, s2, t2)


# --------------------------------------------------------------------------- #
# JAX-side parameter / statistics glue (tiny, per-channel)
# --------------------------------------------------------------------------- #
def _toeplitz_hw(w_dhwio, H, W):
    """(3,3,3,Cin,Cout) -> (3, H*W*Cin, H*W*Cout) 2-D block-Toeplitz for 'SAME' conv."""
    _, _, _, Cin, Cout = w_dhwio.shape
    sel_h = jnp.stack([jnp.eye(H, H, k=1 - kh, dtype=w_dhwio.dtype) for kh in range(3)])
    sel_w = jnp.stack([jnp.eye(W, W, k=1 - kw, dtype=w_dhwio.dtype) for kw in range(3)])
    # WT[kz, (h_in,w_in,ci), (h_out,w_out,co)] = w[kz, h_in-h_out+1, w_in-w_out+1, ci, co]
    wt = jnp.einsum("yap,xbq,zyxio->zabipqo", sel_h, sel_w, w_dhwio)
    return wt.reshape(3, H * W * Cin, H * W * Cout)


def _bn_fold(z_flat, gamma, beta, *, HW):
    """Training-mode BN (biased variance) folded into lane-tiled scale/shift."""
    Cout = gamma.shape[0]
    z = z_flat.reshape(z_flat.shape[0], z_flat.shape[1], HW, Cout)
    mean = z.mean(axis=(0, 1, 2))
    var = jnp.mean((z - mean) ** 2, axis=(0, 1, 2))
    scale = gamma * lax.rsqrt(var + EPS)
    shift = beta - mean * scale
    return jnp.tile(scale, HW)[None, :], jnp.tile(shift, HW)[None, :]


# --------------------------------------------------------------------------- #
# Down3D forward
# --------------------------------------------------------------------------- #
@jax.jit
def down3d_forward(x_ncdhw, params):
    N, Cin, D2, H2, W2 = x_ncdhw.shape
    assert D2 % 2 == 0 and H2 % 2 == 0 and W2 % 2 == 0, "MaxPool3d(2) needs even dims"
    D, H, W = D2 // 2, H2 // 2, W2 // 2
    Cout = params["w1"].shape[-1]
    HW = H * W

    # Layout plumbing in XLA (one small copy): window offsets (dz,hy,wx) become a
    # leading axis of size 8 and (h, w, c) are folded contiguously into the lane dim.
    x = jnp.transpose(x_ncdhw, (0, 2, 3, 4, 1))                 # NDHWC
    x = x.reshape(N, D, 2, H, 2, W, 2, Cin)                     # (n,d,dz,h,hy,w,wx,c)
    x8 = jnp.transpose(x, (0, 2, 4, 6, 1, 3, 5, 7))             # (n,dz,hy,wx,d,h,w,c)
    x8 = x8.reshape(N, 8, D, HW * Cin)

    wt1 = _toeplitz_hw(params["w1"], H, W)                      # (3, HW*Cin,  HW*Cout)
    wt2 = _toeplitz_hw(params["w2"], H, W)                      # (3, HW*Cout, HW*Cout)
    b1t = jnp.tile(params["b1"], HW)[None, :]
    b2t = jnp.tile(params["b2"], HW)[None, :]

    # A: pool + conv1 + bias
    z1 = _pool_conv1(x8, wt1, b1t)                              # (N, D, HW*Cout)
    s1, t1 = _bn_fold(z1, params["g1"], params["bt1"], HW=HW)
    # B: BN1 + ReLU + conv2 + bias
    z2 = _bn_relu_conv2(z1, s1, t1, wt2, b2t)                   # (N, D, HW*Cout)
    s2, t2 = _bn_fold(z2, params["g2"], params["bt2"], HW=HW)
    # C: BN2 + ReLU
    y = _bn_relu(z2, s2, t2)                                    # (N, D, HW*Cout)

    y = y.reshape(N, D, H, W, Cout)
    return jnp.transpose(y, (0, 4, 1, 2, 3))                    # NDHWC -> NCDHW


# --------------------------------------------------------------------------- #
# Pure-JAX reference
# --------------------------------------------------------------------------- #
def down3d_reference(x_ncdhw, params):
    x = jnp.transpose(x_ncdhw, (0, 2, 3, 4, 1))
    N, D, H, W, C = x.shape
    y = x.reshape(N, D // 2, 2, H // 2, 2, W // 2, 2, C).max(axis=(2, 4, 6))

    def block(y, w, b, g, bt):
        z = lax.conv_general_dilated(
            y, w, window_strides=(1, 1, 1), padding="SAME",
            dimension_numbers=("NDHWC", "DHWIO", "NDHWC")) + b
        mean = z.mean(axis=(0, 1, 2, 3))
        var = ((z - mean) ** 2).mean(axis=(0, 1, 2, 3))
        return jax.nn.relu((z - mean) / jnp.sqrt(var + EPS) * g + bt)

    y = block(y, params["w1"], params["b1"], params["g1"], params["bt1"])
    y = block(y, params["w2"], params["b2"], params["g2"], params["bt2"])
    return jnp.transpose(y, (0, 4, 1, 2, 3))


if __name__ == "__main__":
    N, Cin, Cout, S = 2, 4, 8, 8                          # Down3D(in_channels=4, out_channels=8)
    key = jax.random.PRNGKey(0)
    k = jax.random.split(key, 9)
    x = jax.random.normal(k[0], (N, Cin, S, S, S), jnp.float32)
    params = {
        "w1": jax.random.normal(k[1], (3, 3, 3, Cin, Cout), jnp.float32) / jnp.sqrt(27.0 * Cin),
        "b1": 0.1 * jax.random.normal(k[2], (Cout,), jnp.float32),
        "g1": 1.0 + 0.1 * jax.random.normal(k[3], (Cout,), jnp.float32),
        "bt1": 0.1 * jax.random.normal(k[4], (Cout,), jnp.float32),
        "w2": jax.random.normal(k[5], (3, 3, 3, Cout, Cout), jnp.float32) / jnp.sqrt(27.0 * Cout),
        "b2": 0.1 * jax.random.normal(k[6], (Cout,), jnp.float32),
        "g2": 1.0 + 0.1 * jax.random.normal(k[7], (Cout,), jnp.float32),
        "bt2": 0.1 * jax.random.normal(k[8], (Cout,), jnp.float32),
    }

    out = jax.block_until_ready(down3d_forward(x, params))
    ref = jax.block_until_ready(down3d_reference(x, params))

    assert out.shape == (N, Cout, S // 2, S // 2, S // 2), out.shape
    assert jnp.allclose(out, ref, atol=1e-3, rtol=1e-3), float(jnp.max(jnp.abs(out - ref)))
    print("KERNEL_OK")
</pallas_src>

<mosaic_0001>
module attributes {stable_mosaic.version = 11 : i64} {
  func.func @_pool_conv1_kernel(%arg0: i32, %arg1: memref<1x8x4x64xf32, #tpu.memory_space<vmem>>, %arg2: memref<3x64x128xf32, #tpu.memory_space<vmem>>, %arg3: memref<1x128xf32, #tpu.memory_space<vmem>>, %arg4: memref<1x4x128xf32, #tpu.memory_space<vmem>>, %arg5: memref<6x64xf32, #tpu.memory_space<vmem>>) attributes {dimension_semantics = [#tpu.dimension_semantics<parallel>], iteration_bounds = array<i64: 2>, scalar_prefetch = 0 : i64, scratch_operands = 1 : i64, tpu.core_type = #tpu.core_type<tc>, window_params = [{transform_indices = @transform_0, window_bounds = array<i64: 1, 8, 4, 64>}, {pipeline_mode = #tpu.pipeline_mode<synchronous>, transform_indices = @transform_1, window_bounds = array<i64: 3, 64, 128>}, {pipeline_mode = #tpu.pipeline_mode<synchronous>, transform_indices = @transform_2, window_bounds = array<i64: 1, 128>}, {transform_indices = @transform_3, window_bounds = array<i64: 1, 4, 128>}]} {
    %c0 = arith.constant 0 : index
    %c0_0 = arith.constant 0 : index
    %c0_1 = arith.constant 0 : index
    %c0_2 = arith.constant 0 : index
    %0 = vector.load %arg1[%c0, %c0_0, %c0_1, %c0_2] : memref<1x8x4x64xf32, #tpu.memory_space<vmem>>, vector<1x1x4x64xf32>
    %1 = vector.shape_cast %0 : vector<1x1x4x64xf32> to vector<4x64xf32>
    %c0_3 = arith.constant 0 : index
    %c1 = arith.constant 1 : index
    %c0_4 = arith.constant 0 : index
    %c0_5 = arith.constant 0 : index
    %2 = vector.load %arg1[%c0_3, %c1, %c0_4, %c0_5] : memref<1x8x4x64xf32, #tpu.memory_space<vmem>>, vector<1x1x4x64xf32>
    %3 = vector.shape_cast %2 : vector<1x1x4x64xf32> to vector<4x64xf32>
    %4 = arith.maximumf %1, %3 : vector<4x64xf32>
    %c0_6 = arith.constant 0 : index
    %c2 = arith.constant 2 : index
    %c0_7 = arith.constant 0 : index
    %c0_8 = arith.constant 0 : index
    %5 = vector.load %arg1[%c0_6, %c2, %c0_7, %c0_8] : memref<1x8x4x64xf32, #tpu.memory_space<vmem>>, vector<1x1x4x64xf32>
    %6 = vector.shape_cast %5 : vector<1x1x4x64xf32> to vector<4x64xf32>
    %7 = arith.maximumf %4, %6 : vector<4x64xf32>
    %c0_9 = arith.constant 0 : index
    %c3 = arith.constant 3 : index
    %c0_10 = arith.constant 0 : index
    %c0_11 = arith.constant 0 : index
    %8 = vector.load %arg1[%c0_9, %c3, %c0_10, %c0_11] : memref<1x8x4x64xf32, #tpu.memory_space<vmem>>, vector<1x1x4x64xf32>
    %9 = vector.shape_cast %8 : vector<1x1x4x64xf32> to vector<4x64xf32>
    %10 = arith.maximumf %7, %9 : vector<4x64xf32>
    %c0_12 = arith.constant 0 : index
    %c4 = arith.constant 4 : index
    %c0_13 = arith.constant 0 : index
    %c0_14 = arith.constant 0 : index
    %11 = vector.load %arg1[%c0_12, %c4, %c0_13, %c0_14] : memref<1x8x4x64xf32, #tpu.memory_space<vmem>>, vector<1x1x4x64xf32>
    %12 = vector.shape_cast %11 : vector<1x1x4x64xf32> to vector<4x64xf32>
    %13 = arith.maximumf %10, %12 : vector<4x64xf32>
    %c0_15 = arith.constant 0 : index
    %c5 = arith.constant 5 : index
    %c0_16 = arith.constant 0 : index
    %c0_17 = arith.constant 0 : index
    %14 = vector.load %arg1[%c0_15, %c5, %c0_16, %c0_17] : memref<1x8x4x64xf32, #tpu.memory_space<vmem>>, vector<1x1x4x64xf32>
    %15 = vector.shape_cast %14 : vector<1x1x4x64xf32> to vector<4x64xf32>
    %16 = arith.maximumf %13, %15 : vector<4x64xf32>
    %c0_18 = arith.constant 0 : index
    %c6 = arith.constant 6 : index
    %c0_19 = arith.constant 0 : index
    %c0_20 = arith.constant 0 : index
    %17 = vector.load %arg1[%c0_18, %c6, %c0_19, %c0_20] : memref<1x8x4x64xf32, #tpu.memory_space<vmem>>, vector<1x1x4x64xf32>
    %18 = vector.shape_cast %17 : vector<1x1x4x64xf32> to vector<4x64xf32>
    %19 = arith.maximumf %16, %18 : vector<4x64xf32>
    %c0_21 = arith.constant 0 : index
    %c7 = arith.constant 7 : index
    %c0_22 = arith.constant 0 : index
    %c0_23 = arith.constant 0 : index
    %20 = vector.load %arg1[%c0_21, %c7, %c0_22, %c0_23] : memref<1x8x4x64xf32, #tpu.memory_space<vmem>>, vector<1x1x4x64xf32>
    %21 = vector.shape_cast %20 : vector<1x1x4x64xf32> to vector<4x64xf32>
    %22 = arith.maximumf %19, %21 : vector<4x64xf32>
    %cst = arith.constant 0.000000e+00 : f32
    %23 = vector.broadcast %cst : f32 to vector<1x64xf32>
    %c0_24 = arith.constant 0 : index
    %c0_25 = arith.constant 0 : index
    %24 = vector.load %arg5[%c0_24, %c0_25] : memref<6x64xf32, #tpu.memory_space<vmem>>, vector<1x64xf32>
    tpu.vector_store %arg5[%c0_24, %c0_25], %23 {strides = array<i32>} : memref<6x64xf32, #tpu.memory_space<vmem>>, vector<1x64xf32>,
    %cst_26 = arith.constant 0.000000e+00 : f32
    %25 = vector.broadcast %cst_26 : f32 to vector<1x64xf32>
    %c5_27 = arith.constant 5 : index
    %c0_28 = arith.constant 0 : index
    %26 = vector.load %arg5[%c5_27, %c0_28] : memref<6x64xf32, #tpu.memory_space<vmem>>, vector<1x64xf32>
    tpu.vector_store %arg5[%c5_27, %c0_28], %25 {strides = array<i32>} : memref<6x64xf32, #tpu.memory_space<vmem>>, vector<1x64xf32>,
    %c1_29 = arith.constant 1 : index
    %c0_30 = arith.constant 0 : index
    %27 = vector.load %arg5[%c1_29, %c0_30] : memref<6x64xf32, #tpu.memory_space<vmem>>, vector<4x64xf32>
    tpu.vector_store %arg5[%c1_29, %c0_30], %22 {strides = array<i32>} : memref<6x64xf32, #tpu.memory_space<vmem>>, vector<4x64xf32>,
    %c0_31 = arith.constant 0 : index
    %c0_32 = arith.constant 0 : index
    %28 = vector.load %arg5[%c0_31, %c0_32] : memref<6x64xf32, #tpu.memory_space<vmem>>, vector<4x64xf32>
    %c0_33 = arith.constant 0 : index
    %c0_34 = arith.constant 0 : index
    %c0_35 = arith.constant 0 : index
    %29 = vector.load %arg2[%c0_33, %c0_34, %c0_35] : memref<3x64x128xf32, #tpu.memory_space<vmem>>, vector<1x64x128xf32>
    %30 = vector.shape_cast %29 : vector<1x64x128xf32> to vector<64x128xf32>
    %cst_36 = arith.constant dense<0.000000e+00> : vector<4x128xf32>
    %31 = tpu.matmul %28, %30, %cst_36 {dimension_numbers = #tpu.dot_dimension_numbers<[1], [0], [0], [1], [0, 0, 1, 1], [], []>} : vector<4x64xf32>, vector<64x128xf32>, vector<4x128xf32> -> vector<4x128xf32>
    %c1_37 = arith.constant 1 : index
    %c0_38 = arith.constant 0 : index
    %32 = vector.load %arg5[%c1_37, %c0_38] : memref<6x64xf32, #tpu.memory_space<vmem>>, vector<4x64xf32>
    %c1_39 = arith.constant 1 : index
    %c0_40 = arith.constant 0 : index
    %c0_41 = arith.constant 0 : index
    %33 = vector.load %arg2[%c1_39, %c0_40, %c0_41] : memref<3x64x128xf32, #tpu.memory_space<vmem>>, vector<1x64x128xf32>
    %34 = vector.shape_cast %33 : vector<1x64x128xf32> to vector<64x128xf32>
    %cst_42 = arith.constant dense<0.000000e+00> : vector<4x128xf32>
    %35 = tpu.matmul %32, %34, %cst_42 {dimension_numbers = #tpu.dot_dimension_numbers<[1], [0], [0], [1], [0, 0, 1, 1], [], []>} : vector<4x64xf32>, vector<64x128xf32>, vector<4x128xf32> -> vector<4x128xf32>
    %36 = arith.addf %31, %35 : vector<4x128xf32>
    %c2_43 = arith.constant 2 : index
    %c0_44 = arith.constant 0 : index
    %37 = vector.load %arg5[%c2_43, %c0_44] : memref<6x64xf32, #tpu.memory_space<vmem>>, vector<4x64xf32>
    %c2_45 = arith.constant 2 : index
    %c0_46 = arith.constant 0 : index
    %c0_47 = arith.constant 0 : index
    %38 = vector.load %arg2[%c2_45, %c0_46, %c0_47] : memref<3x64x128xf32, #tpu.memory_space<vmem>>, vector<1x64x128xf32>
    %39 = vector.shape_cast %38 : vector<1x64x128xf32> to vector<64x128xf32>
    %cst_48 = arith.constant dense<0.000000e+00> : vector<4x128xf32>
    %40 = tpu.matmul %37, %39, %cst_48 {dimension_numbers = #tpu.dot_dimension_numbers<[1], [0], [0], [1], [0, 0, 1, 1], [], []>} : vector<4x64xf32>, vector<64x128xf32>, vector<4x128xf32> -> vector<4x128xf32>
    %41 = arith.addf %36, %40 : vector<4x128xf32>
    %c0_49 = arith.constant 0 : index
    %c0_50 = arith.constant 0 : index
    %42 = vector.load %arg3[%c0_49, %c0_50] : memref<1x128xf32, #tpu.memory_space<vmem>>, vector<1x128xf32>
    %43 = vector.broadcast %42 : vector<1x128xf32> to vector<4x128xf32>
    %44 = arith.addf %41, %43 : vector<4x128xf32>
    %c0_51 = arith.constant 0 : index
    %c0_52 = arith.constant 0 : index
    %c0_53 = arith.constant 0 : index
    %45 = vector.load %arg4[%c0_51, %c0_52, %c0_53] : memref<1x4x128xf32, #tpu.memory_space<vmem>>, vector<1x4x128xf32>
    %46 = vector.shape_cast %45 : vector<1x4x128xf32> to vector<4x128xf32>
    %47 = vector.shape_cast %44 : vector<4x128xf32> to vector<1x4x128xf32>
    tpu.vector_store %arg4[%c0_51, %c0_52, %c0_53], %47 {strides = array<i32>} : memref<1x4x128xf32, #tpu.memory_space<vmem>>, vector<1x4x128xf32>,
    return
  }
  func.func @transform_0(%arg0: i32) -> (i32, i32, i32, i32) {
    %c0_i32 = arith.constant 0 : i32
    %c0_i32_0 = arith.constant 0 : i32
    %c0_i32_1 = arith.constant 0 : i32
    %c0_i32_2 = arith.constant 0 : i32
    return %arg0, %c0_i32, %c0_i32_0, %c0_i32_1 : i32, i32, i32, i32
  }
  func.func @transform_1(%arg0: i32) -> (i32, i32, i32) {
    %c0_i32 = arith.constant 0 : i32
    %c0_i32_0 = arith.constant 0 : i32
    %c0_i32_1 = arith.constant 0 : i32
    %c0_i32_2 = arith.constant 0 : i32
    return %c0_i32, %c0_i32_0, %c0_i32_1 : i32, i32, i32
  }
  func.func @transform_2(%arg0: i32) -> (i32, i32) {
    %c0_i32 = arith.constant 0 : i32
    %c0_i32_0 = arith.constant 0 : i32
    %c0_i32_1 = arith.constant 0 : i32
    return %c0_i32, %c0_i32_0 : i32, i32
  }
  func.func @transform_3(%arg0: i32) -> (i32, i32, i32) {
    %c0_i32 = arith.constant 0 : i32
    %c0_i32_0 = arith.constant 0 : i32
    %c0_i32_1 = arith.constant 0 : i32
    return %arg0, %c0_i32, %c0_i32_0 : i32, i32, i32
  }
}

module attributes {stable_mosaic.version = 11 : i64} {
  func.func @_bn_relu_conv2_kernel(%arg0: i32, %arg1: memref<1x4x128xf32, #tpu.memory_space<vmem>>, %arg2: memref<1x128xf32, #tpu.memory_space<vmem>>, %arg3: memref<1x128xf32, #tpu.memory_space<vmem>>, %arg4: memref<3x128x128xf32, #tpu.memory_space<vmem>>, %arg5: memref<1x128xf32, #tpu.memory_space<vmem>>, %arg6: memref<1x4x128xf32, #tpu.memory_space<vmem>>, %arg7: memref<6x128xf32, #tpu.memory_space<vmem>>) attributes {dimension_semantics = [#tpu.dimension_semantics<parallel>], iteration_bounds = array<i64: 2>, scalar_prefetch = 0 : i64, scratch_operands = 1 : i64, tpu.core_type = #tpu.core_type<tc>, window_params = [{transform_indices = @transform_0, window_bounds = array<i64: 1, 4, 128>}, {pipeline_mode = #tpu.pipeline_mode<synchronous>, transform_indices = @transform_1, window_bounds = array<i64: 1, 128>}, {pipeline_mode = #tpu.pipeline_mode<synchronous>, transform_indices = @transform_2, window_bounds = array<i64: 1, 128>}, {pipeline_mode = #tpu.pipeline_mode<synchronous>, transform_indices = @transform_3, window_bounds = array<i64: 3, 128, 128>}, {pipeline_mode = #tpu.pipeline_mode<synchronous>, transform_indices = @transform_4, window_bounds = array<i64: 1, 128>}, {transform_indices = @transform_5, window_bounds = array<i64: 1, 4, 128>}]} {
    %c0 = arith.constant 0 : index
    %c0_0 = arith.constant 0 : index
    %c0_1 = arith.constant 0 : index
    %0 = vector.load %arg1[%c0, %c0_0, %c0_1] : memref<1x4x128xf32, #tpu.memory_space<vmem>>, vector<1x4x128xf32>
    %1 = vector.shape_cast %0 : vector<1x4x128xf32> to vector<4x128xf32>
    %c0_2 = arith.constant 0 : index
    %c0_3 = arith.constant 0 : index
    %2 = vector.load %arg2[%c0_2, %c0_3] : memref<1x128xf32, #tpu.memory_space<vmem>>, vector<1x128xf32>
    %3 = vector.broadcast %2 : vector<1x128xf32> to vector<4x128xf32>
    %4 = arith.mulf %1, %3 : vector<4x128xf32>
    %c0_4 = arith.constant 0 : index
    %c0_5 = arith.constant 0 : index
    %5 = vector.load %arg3[%c0_4, %c0_5] : memref<1x128xf32, #tpu.memory_space<vmem>>, vector<1x128xf32>
    %6 = vector.broadcast %5 : vector<1x128xf32> to vector<4x128xf32>
    %7 = arith.addf %4, %6 : vector<4x128xf32>
    %cst = arith.constant 0.000000e+00 : f32
    %8 = vector.broadcast %cst : f32 to vector<4x128xf32>
    %9 = arith.maximumf %7, %8 : vector<4x128xf32>
    %cst_6 = arith.constant 0.000000e+00 : f32
    %10 = vector.broadcast %cst_6 : f32 to vector<1x128xf32>
    %c0_7 = arith.constant 0 : index
    %c0_8 = arith.constant 0 : index
    %11 = vector.load %arg7[%c0_7, %c0_8] : memref<6x128xf32, #tpu.memory_space<vmem>>, vector<1x128xf32>
    tpu.vector_store %arg7[%c0_7, %c0_8], %10 {strides = array<i32>} : memref<6x128xf32, #tpu.memory_space<vmem>>, vector<1x128xf32>,
    %cst_9 = arith.constant 0.000000e+00 : f32
    %12 = vector.broadcast %cst_9 : f32 to vector<1x128xf32>
    %c5 = arith.constant 5 : index
    %c0_10 = arith.constant 0 : index
    %13 = vector.load %arg7[%c5, %c0_10] : memref<6x128xf32, #tpu.memory_space<vmem>>, vector<1x128xf32>
    tpu.vector_store %arg7[%c5, %c0_10], %12 {strides = array<i32>} : memref<6x128xf32, #tpu.memory_space<vmem>>, vector<1x128xf32>,
    %c1 = arith.constant 1 : index
    %c0_11 = arith.constant 0 : index
    %14 = vector.load %arg7[%c1, %c0_11] : memref<6x128xf32, #tpu.memory_space<vmem>>, vector<4x128xf32>
    tpu.vector_store %arg7[%c1, %c0_11], %9 {strides = array<i32>} : memref<6x128xf32, #tpu.memory_space<vmem>>, vector<4x128xf32>,
    %c0_12 = arith.constant 0 : index
    %c0_13 = arith.constant 0 : index
    %15 = vector.load %arg7[%c0_12, %c0_13] : memref<6x128xf32, #tpu.memory_space<vmem>>, vector<4x128xf32>
    %c0_14 = arith.constant 0 : index
    %c0_15 = arith.constant 0 : index
    %c0_16 = arith.constant 0 : index
    %16 = vector.load %arg4[%c0_14, %c0_15, %c0_16] : memref<3x128x128xf32, #tpu.memory_space<vmem>>, vector<1x128x128xf32>
    %17 = vector.shape_cast %16 : vector<1x128x128xf32> to vector<128x128xf32>
    %cst_17 = arith.constant dense<0.000000e+00> : vector<4x128xf32>
    %18 = tpu.matmul %15, %17, %cst_17 {dimension_numbers = #tpu.dot_dimension_numbers<[1], [0], [0], [1], [0, 0, 1, 1], [], []>} : vector<4x128xf32>, vector<128x128xf32>, vector<4x128xf32> -> vector<4x128xf32>
    %c1_18 = arith.constant 1 : index
    %c0_19 = arith.constant 0 : index
    %19 = vector.load %arg7[%c1_18, %c0_19] : memref<6x128xf32, #tpu.memory_space<vmem>>, vector<4x128xf32>
    %c1_20 = arith.constant 1 : index
    %c0_21 = arith.constant 0 : index
    %c0_22 = arith.constant 0 : index
    %20 = vector.load %arg4[%c1_20, %c0_21, %c0_22] : memref<3x128x128xf32, #tpu.memory_space<vmem>>, vector<1x128x128xf32>
    %21 = vector.shape_cast %20 : vector<1x128x128xf32> to vector<128x128xf32>
    %cst_23 = arith.constant dense<0.000000e+00> : vector<4x128xf32>
    %22 = tpu.matmul %19, %21, %cst_23 {dimension_numbers = #tpu.dot_dimension_numbers<[1], [0], [0], [1], [0, 0, 1, 1], [], []>} : vector<4x128xf32>, vector<128x128xf32>, vector<4x128xf32> -> vector<4x128xf32>
    %23 = arith.addf %18, %22 : vector<4x128xf32>
    %c2 = arith.constant 2 : index
    %c0_24 = arith.constant 0 : index
    %24 = vector.load %arg7[%c2, %c0_24] : memref<6x128xf32, #tpu.memory_space<vmem>>, vector<4x128xf32>
    %c2_25 = arith.constant 2 : index
    %c0_26 = arith.constant 0 : index
    %c0_27 = arith.constant 0 : index
    %25 = vector.load %arg4[%c2_25, %c0_26, %c0_27] : memref<3x128x128xf32, #tpu.memory_space<vmem>>, vector<1x128x128xf32>
    %26 = vector.shape_cast %25 : vector<1x128x128xf32> to vector<128x128xf32>
    %cst_28 = arith.constant dense<0.000000e+00> : vector<4x128xf32>
    %27 = tpu.matmul %24, %26, %cst_28 {dimension_numbers = #tpu.dot_dimension_numbers<[1], [0], [0], [1], [0, 0, 1, 1], [], []>} : vector<4x128xf32>, vector<128x128xf32>, vector<4x128xf32> -> vector<4x128xf32>
    %28 = arith.addf %23, %27 : vector<4x128xf32>
    %c0_29 = arith.constant 0 : index
    %c0_30 = arith.constant 0 : index
    %29 = vector.load %arg5[%c0_29, %c0_30] : memref<1x128xf32, #tpu.memory_space<vmem>>, vector<1x128xf32>
    %30 = vector.broadcast %29 : vector<1x128xf32> to vector<4x128xf32>
    %31 = arith.addf %28, %30 : vector<4x128xf32>
    %c0_31 = arith.constant 0 : index
    %c0_32 = arith.constant 0 : index
    %c0_33 = arith.constant 0 : index
    %32 = vector.load %arg6[%c0_31, %c0_32, %c0_33] : memref<1x4x128xf32, #tpu.memory_space<vmem>>, vector<1x4x128xf32>
    %33 = vector.shape_cast %32 : vector<1x4x128xf32> to vector<4x128xf32>
    %34 = vector.shape_cast %31 : vector<4x128xf32> to vector<1x4x128xf32>
    tpu.vector_store %arg6[%c0_31, %c0_32, %c0_33], %34 {strides = array<i32>} : memref<1x4x128xf32, #tpu.memory_space<vmem>>, vector<1x4x128xf32>,
    return
  }
  func.func @transform_0(%arg0: i32) -> (i32, i32, i32) {
    %c0_i32 = arith.constant 0 : i32
    %c0_i32_0 = arith.constant 0 : i32
    %c0_i32_1 = arith.constant 0 : i32
    return %arg0, %c0_i32, %c0_i32_0 : i32, i32, i32
  }
  func.func @transform_1(%arg0: i32) -> (i32, i32) {
    %c0_i32 = arith.constant 0 : i32
    %c0_i32_0 = arith.constant 0 : i32
    %c0_i32_1 = arith.constant 0 : i32
    return %c0_i32, %c0_i32_0 : i32, i32
  }
  func.func @transform_2(%arg0: i32) -> (i32, i32) {
    %c0_i32 = arith.constant 0 : i32
    %c0_i32_0 = arith.constant 0 : i32
    %c0_i32_1 = arith.constant 0 : i32
    return %c0_i32, %c0_i32_0 : i32, i32
  }
  func.func @transform_3(%arg0: i32) -> (i32, i32, i32) {
    %c0_i32 = arith.constant 0 : i32
    %c0_i32_0 = arith.constant 0 : i32
    %c0_i32_1 = arith.constant 0 : i32
    %c0_i32_2 = arith.constant 0 : i32
    return %c0_i32, %c0_i32_0, %c0_i32_1 : i32, i32, i32
  }
  func.func @transform_4(%arg0: i32) -> (i32, i32) {
    %c0_i32 = arith.constant 0 : i32
    %c0_i32_0 = arith.constant 0 : i32
    %c0_i32_1 = arith.constant 0 : i32
    return %c0_i32, %c0_i32_0 : i32, i32
  }
  func.func @transform_5(%arg0: i32) -> (i32, i32, i32) {
    %c0_i32 = arith.constant 0 : i32
    %c0_i32_0 = arith.constant 0 : i32
    %c0_i32_1 = arith.constant 0 : i32
    return %arg0, %c0_i32, %c0_i32_0 : i32, i32, i32
  }
}

module attributes {stable_mosaic.version = 11 : i64} {
  func.func @_bn_relu_kernel(%arg0: i32, %arg1: memref<1x4x128xf32, #tpu.memory_space<vmem>>, %arg2: memref<1x128xf32, #tpu.memory_space<vmem>>, %arg3: memref<1x128xf32, #tpu.memory_space<vmem>>, %arg4: memref<1x4x128xf32, #tpu.memory_space<vmem>>) attributes {dimension_semantics = [#tpu.dimension_semantics<parallel>], iteration_bounds = array<i64: 2>, scalar_prefetch = 0 : i64, scratch_operands = 0 : i64, tpu.core_type = #tpu.core_type<tc>, window_params = [{transform_indices = @transform_0, window_bounds = array<i64: 1, 4, 128>}, {pipeline_mode = #tpu.pipeline_mode<synchronous>, transform_indices = @transform_1, window_bounds = array<i64: 1, 128>}, {pipeline_mode = #tpu.pipeline_mode<synchronous>, transform_indices = @transform_2, window_bounds = array<i64: 1, 128>}, {transform_indices = @transform_3, window_bounds = array<i64: 1, 4, 128>}]} {
    %c0 = arith.constant 0 : index
    %c0_0 = arith.constant 0 : index
    %c0_1 = arith.constant 0 : index
    %0 = vector.load %arg1[%c0, %c0_0, %c0_1] : memref<1x4x128xf32, #tpu.memory_space<vmem>>, vector<1x4x128xf32>
    %c0_2 = arith.constant 0 : index
    %c0_3 = arith.constant 0 : index
    %1 = vector.load %arg2[%c0_2, %c0_3] : memref<1x128xf32, #tpu.memory_space<vmem>>, vector<1x128xf32>
    %2 = vector.shape_cast %1 : vector<1x128xf32> to vector<1x1x128xf32>
    %3 = vector.broadcast %2 : vector<1x1x128xf32> to vector<1x4x128xf32>
    %4 = arith.mulf %0, %3 : vector<1x4x128xf32>
    %c0_4 = arith.constant 0 : index
    %c0_5 = arith.constant 0 : index
    %5 = vector.load %arg3[%c0_4, %c0_5] : memref<1x128xf32, #tpu.memory_space<vmem>>, vector<1x128xf32>
    %6 = vector.shape_cast %5 : vector<1x128xf32> to vector<1x1x128xf32>
    %7 = vector.broadcast %6 : vector<1x1x128xf32> to vector<1x4x128xf32>
    %8 = arith.addf %4, %7 : vector<1x4x128xf32>
    %cst = arith.constant 0.000000e+00 : f32
    %9 = vector.broadcast %cst : f32 to vector<1x4x128xf32>
    %10 = arith.maximumf %8, %9 : vector<1x4x128xf32>
    %c0_6 = arith.constant 0 : index
    %c0_7 = arith.constant 0 : index
    %c0_8 = arith.constant 0 : index
    %11 = vector.load %arg4[%c0_6, %c0_7, %c0_8] : memref<1x4x128xf32, #tpu.memory_space<vmem>>, vector<1x4x128xf32>
    tpu.vector_store %arg4[%c0_6, %c0_7, %c0_8], %10 {strides = array<i32>} : memref<1x4x128xf32, #tpu.memory_space<vmem>>, vector<1x4x128xf32>,
    return
  }
  func.func @transform_0(%arg0: i32) -> (i32, i32, i32) {
    %c0_i32 = arith.constant 0 : i32
    %c0_i32_0 = arith.constant 0 : i32
    %c0_i32_1 = arith.constant 0 : i32
    return %arg0, %c0_i32, %c0_i32_0 : i32, i32, i32
  }
  func.func @transform_1(%arg0: i32) -> (i32, i32) {
    %c0_i32 = arith.constant 0 : i32
    %c0_i32_0 = arith.constant 0 : i32
    %c0_i32_1 = arith.constant 0 : i32
    return %c0_i32, %c0_i32_0 : i32, i32
  }
  func.func @transform_2(%arg0: i32) -> (i32, i32) {
    %c0_i32 = arith.constant 0 : i32
    %c0_i32_0 = arith.constant 0 : i32
    %c0_i32_1 = arith.constant 0 : i32
    return %c0_i32, %c0_i32_0 : i32, i32
  }
  func.func @transform_3(%arg0: i32) -> (i32, i32, i32) {
    %c0_i32 = arith.constant 0 : i32
    %c0_i32_0 = arith.constant 0 : i32
    %c0_i32_1 = arith.constant 0 : i32
    return %arg0, %c0_i32, %c0_i32_0 : i32, i32, i32
  }
}

</mosaic_0001>

<llo_original>
// kernel: tile.33
$region0: #{tile.33}
  #allocation0 [shape = 's32[1]{0}', space=sflag, size = 0x4, scoped, tag = 'scoped memory for tile.33']
  %s0 = inlined_call_operand.vmem [shape: f32[8], index: 0, kind: input, shape index: {}]
  %s1 = inlined_call_operand.vmem [shape: f32[16,8], index: 1, kind: output, shape index: {}]
  // Predicated region
  $region2: #{tile.33} parent=0 // pred_check
    _
  $region3: #{tile.33} parent=0 // pred_check_branch
    %3 = sbr.rel (0) target = $region5
  $region4: #{tile.33} parent=0 // pred_region
    _
  $region5: #{tile.33} parent=0 // pred_fallthru
    _
  %v4 = vld [vmem:[%s0] ss:$0 sm:$0xff]
  %5 = vst [vmem:[%s1] sm:$0xff] %v4
  %s6 = scalar_lea.vmem %s1, 8
  %7 = vst [vmem:[%s6] sm:$0xff] %v4

// kernel: tile.34
$region0: #{tile.34}
  %s0 = inlined_call_operand.vmem [shape: f32[16,8], index: 0, kind: input, shape index: {}]
  %s1 = inlined_call_operand.vmem [shape: f32[1,128], index: 1, kind: output, shape index: {}]
  $region1: #{tile.34} parent=0
    #allocation0 [shape = 'u8[4096]{0}', space=vmem, size = 0x1000, scoped, tag = 'scoped mem for output reshape']
    %v2 = vld [vmem:[%s0] sm:$0x1]
    %vm3 = vcmask 64512
    %4 = vst.msk [vmem:[#allocation0] sm:$0x1] %vm3, %v2
    %s5 = scalar_lea.vmem %s0, 15
    %v6 = vld [vmem:[%s5] sm:$0x1]
    %7 = vrot.lane.b32.xlu0 %v6, 120
    %v8 = vpop.permute.xlu0 %7
    %vm9 = vcmask 1048512
    %10 = vst.msk [vmem:[#allocation0] sm:$0x1] %vm9, %v8
    %s11 = scalar_lea.vmem %s0, 14
    %v12 = vld [vmem:[%s11] sm:$0x1]
    %13 = vrot.lane.b32.xlu0 %v12, 112
    %v14 = vpop.permute.xlu0 %13
    %vm15 = vcmask 982912
    %16 = vst.msk [vmem:[#allocation0] sm:$0x1] %vm15, %v14
    %s17 = scalar_lea.vmem %s0, 13
    %v18 = vld [vmem:[%s17] sm:$0x1]
    %19 = vrot.lane.b32.xlu0 %v18, 104
    %v20 = vpop.permute.xlu0 %19
    %vm21 = vcmask 917312
    %22 = vst.msk [vmem:[#allocation0] sm:$0x1] %vm21, %v20
    %s23 = scalar_lea.vmem %s0, 12
    %v24 = vld [vmem:[%s23] sm:$0x1]
    %25 = vrot.lane.b32.xlu0 %v24, 96
    %v26 = vpop.permute.xlu0 %25
    %vm27 = vcmask 851712
    %28 = vst.msk [vmem:[#allocation0] sm:$0x1] %vm27, %v26
    %s29 = scalar_lea.vmem %s0, 11
    %v30 = vld [vmem:[%s29] sm:$0x1]
    %31 = vrot.lane.b32.xlu0 %v30, 88
    %v32 = vpop.permute.xlu0 %31
    %vm33 = vcmask 786112
    %34 = vst.msk [vmem:[#allocation0] sm:$0x1] %vm33, %v32
    %s35 = scalar_lea.vmem %s0, 10
    %v36 = vld [vmem:[%s35] sm:$0x1]
    %37 = vrot.lane.b32.xlu0 %v36, 80
    %v38 = vpop.permute.xlu0 %37
    %vm39 = vcmask 720512
    %40 = vst.msk [vmem:[#allocation0] sm:$0x1] %vm39, %v38
    %s41 = scalar_lea.vmem %s0, 9
    %v42 = vld [vmem:[%s41] sm:$0x1]
    %43 = vrot.lane.b32.xlu0 %v42, 72
    %v44 = vpop.permute.xlu0 %43
    %vm45 = vcmask 654912
    %46 = vst.msk [vmem:[#allocation0] sm:$0x1] %vm45, %v44
    %s47 = scalar_lea.vmem %s0, 8
    %v48 = vld [vmem:[%s47] sm:$0x1]
    %49 = vrot.lane.b32.xlu0 %v48, 64
    %v50 = vpop.permute.xlu0 %49
    %vm51 = vcmask 589312
    %52 = vst.msk [vmem:[#allocation0] sm:$0x1] %vm51, %v50
    %s53 = scalar_lea.vmem %s0, 7
    %v54 = vld [vmem:[%s53] sm:$0x1]
    %55 = vrot.lane.b32.xlu0 %v54, 56
    %v56 = vpop.permute.xlu0 %55
    %vm57 = vcmask 523712
    %58 = vst.msk [vmem:[#allocation0] sm:$0x1] %vm57, %v56
    %s59 = scalar_lea.vmem %s0, 6
    %v60 = vld [vmem:[%s59] sm:$0x1]
    %61 = vrot.lane.b32.xlu0 %v60, 48
    %v62 = vpop.permute.xlu0 %61
    %vm63 = vcmask 458112
    %64 = vst.msk [vmem:[#allocation0] sm:$0x1] %vm63, %v62
    %s65 = scalar_lea.vmem %s0, 5
    %v66 = vld [vmem:[%s65] sm:$0x1]
    %67 = vrot.lane.b32.xlu0 %v66, 40
    %v68 = vpop.permute.xlu0 %67
    %vm69 = vcmask 392512
    %70 = vst.msk [vmem:[#allocation0] sm:$0x1] %vm69, %v68
    %s71 = scalar_lea.vmem %s0, 4
    %v72 = vld [vmem:[%s71] sm:$0x1]
    %73 = vrot.lane.b32.xlu0 %v72, 32
    %v74 = vpop.permute.xlu0 %73
    %vm75 = vcmask 326912
    %76 = vst.msk [vmem:[#allocation0] sm:$0x1] %vm75, %v74
    %s77 = scalar_lea.vmem %s0, 3
    %v78 = vld [vmem:[%s77] sm:$0x1]
    %79 = vrot.lane.b32.xlu0 %v78, 24
    %v80 = vpop.permute.xlu0 %79
    %vm81 = vcmask 261312
    %82 = vst.msk [vmem:[#allocation0] sm:$0x1] %vm81, %v80
    %s83 = scalar_lea.vmem %s0, 2
    %v84 = vld [vmem:[%s83] sm:$0x1]
    %85 = vrot.lane.b32.xlu0 %v84, 16
    %v86 = vpop.permute.xlu0 %85
    %vm87 = vcmask 195712
    %88 = vst.msk [vmem:[#allocation0] sm:$0x1] %vm87, %v86
    %s89 = scalar_lea.vmem %s0, 1
    %v90 = vld [vmem:[%s89] sm:$0x1]
    %91 = vrot.lane.b32.xlu0 %v90, 8
    %v92 = vpop.permute.xlu0 %91
    %vm93 = vcmask 130112
    %94 = vst.msk [vmem:[#allocation0] sm:$0x1] %vm93, %v92
    %s96 = sshll.u32 1, 1
    %s97 = ssub.s32 %s96, 1
    %v99 = vld [vmem:[#allocation0] sm:%s97]
    %s100 = sshll.u32 1, 1
    %s101 = ssub.s32 %s100, 1
    %102 = vst [vmem:[%s1] sm:%s101] %v99

// kernel: down3d_forward.3
$region0: #{down3d_forward.3}
  #allocation0 [shape = 'u32[]', space=smem, size = 0x4, offset = 0x4, fixed_abs, tag = 'smem constant byte address 0x4 - core index']
  #allocation1 [shape = 'u32[144,128]{1,0:T(1,128)}', space=vmem, size = 0x12000, scoped, tag = 'internal scratch']
  #allocation2 [shape = 'f32[6,64]{1,0:T(8,128)}', space=vmem, size = 0x1000, scoped, tag = 'scratch operand']
  %s0 = inlined_call_operand.vmem [shape: f32[2,8,4,64], index: 0, kind: input, shape index: {}]
  %s1 = inlined_call_operand.vmem [shape: f32[3,64,128], index: 1, kind: input, shape index: {}]
  %s2 = inlined_call_operand.vmem [shape: f32[1,128], index: 2, kind: input, shape index: {}]
  %s3 = inlined_call_operand.vmem [shape: f32[2,4,128], index: 3, kind: output, shape index: {}]
  %s4 = sld [smem:[#allocation0]]
  $region45: #{down3d_forward.3} parent=0
    _
  %s6 = ssub.s32 1, %s4
  %s7 = scalar_select 0, %s6, %s4
  loop: start=0, step=1, limit=4
  $region2: #{down3d_forward.3} parent=0 // loop_pre_header
    _
  $region3: #{down3d_forward.3} parent=0 // loop_header
    %s9 = sphi 0, %s13
    %p10 = scmp.ge.s32.totalorder %s9, 4
    %s19 = sphi 0, %s21
    %s22 = sphi 0, %s19
    %s23 = sphi 0, %s22
    %s39 = sphi 0, %s23
    %s43 = sphi 0, %s43
    %s45 = sphi 0, %s43
    %s46 = sphi 0, %s45
    %s60 = sphi 0, %s46
    %s64 = sphi 0, %s64
    %s66 = sphi 0, %s64
    %s67 = sphi 0, %s66
    %s81 = sphi 0, %s67
    %s87 = sphi 0, %s89
    %s90 = sphi 0, %s87
    %s91 = sphi 0, %s90
    %s107 = sphi 0, %s91
  $region4: #{down3d_forward.3} parent=0 // loop_header_branch
    %12 = sbr.rel (%p10) target = $region8
  $region5: #{down3d_forward.3} parent=0 // loop_body
    %s14 = ssub.s32 %s9, 1
    %s15 = ssub.s32 %s9, 2
    %s16 = sadd.s32 %s9, 1
    %s17 = ssub.s32 %s9, %s16
    %p18 = scmp.eq.s32.totalorder %s17, 0
    %s20 = sadd.s32 %s19, 1
    %s21 = scalar_select %p18, %s19, %s20
    %p24 = pneg %p18
    %p25 = scmp.eq.s32.totalorder %s9, 1
    %p26 = por %p24, %p25
    %p27 = scmp.ne.s32.totalorder %s19, %s22
    %p28 = scmp.eq.s32.totalorder %s9, 0
    %p29 = por %p27, %p28
    %p30 = scmp.ne.s32.totalorder %s19, %s22
    %p31 = scmp.eq.s32.totalorder %s14, 1
    %p32 = por %p30, %p31
    %p33 = scmp.ne.s32.totalorder %s22, %s23
    %p34 = scmp.eq.s32.totalorder %s14, 0
    %p35 = por %p33, %p34
    %p36 = scmp.ne.s32.totalorder %s22, %s23
    %p37 = scmp.eq.s32.totalorder %s15, 1
    %p38 = por %p36, %p37
    %p40 = scmp.ne.s32.totalorder %s23, %s39
    %p41 = scmp.eq.s32.totalorder %s15, 0
    %p42 = por %p40, %p41
    %s44 = sadd.s32 %s43, 1
    %p47 = scmp.eq.s32.totalorder %s9, 1
    %p48 = scmp.ne.s32.totalorder %s43, %s45
    %p49 = scmp.eq.s32.totalorder %s9, 0
    %p50 = por %p48, %p49
    %p51 = scmp.ne.s32.totalorder %s43, %s45
    %p52 = scmp.eq.s32.totalorder %s14, 1
    %p53 = por %p51, %p52
    %p54 = scmp.ne.s32.totalorder %s45, %s46
    %p55 = scmp.eq.s32.totalorder %s14, 0
    %p56 = por %p54, %p55
    %p57 = scmp.ne.s32.totalorder %s45, %s46
    %p58 = scmp.eq.s32.totalorder %s15, 1
    %p59 = por %p57, %p58
    %p61 = scmp.ne.s32.totalorder %s46, %s60
    %p62 = scmp.eq.s32.totalorder %s15, 0
    %p63 = por %p61, %p62
    %s65 = sadd.s32 %s64, 1
    %p68 = scmp.eq.s32.totalorder %s9, 1
    %p69 = scmp.ne.s32.totalorder %s64, %s66
    %p70 = scmp.eq.s32.totalorder %s9, 0
    %p71 = por %p69, %p70
    %p72 = scmp.ne.s32.totalorder %s64, %s66
    %p73 = scmp.eq.s32.totalorder %s14, 1
    %p74 = por %p72, %p73
    %p75 = scmp.ne.s32.totalorder %s66, %s67
    %p76 = scmp.eq.s32.totalorder %s14, 0
    %p77 = por %p75, %p76
    %p78 = scmp.ne.s32.totalorder %s66, %s67
    %p79 = scmp.eq.s32.totalorder %s15, 1
    %p80 = por %p78, %p79
    %p82 = scmp.ne.s32.totalorder %s67, %s81
    %p83 = scmp.eq.s32.totalorder %s15, 0
    %p84 = por %p82, %p83
    %s85 = ssub.s32 %s9, %s16
    %p86 = scmp.eq.s32.totalorder %s85, 0
    %s88 = sadd.s32 %s87, 1
    %s89 = scalar_select %p86, %s87, %s88
    %p92 = pneg %p86
    %p93 = scmp.eq.s32.totalorder %s9, 1
    %p94 = por %p92, %p93
    %p95 = scmp.ne.s32.totalorder %s87, %s90
    %p96 = scmp.eq.s32.totalorder %s9, 0
    %p97 = por %p95, %p96
    %p98 = scmp.ne.s32.totalorder %s87, %s90
    %p99 = scmp.eq.s32.totalorder %s14, 1
    %p100 = por %p98, %p99
    %p101 = scmp.ne.s32.totalorder %s90, %s91
    %p102 = scmp.eq.s32.totalorder %s14, 0
    %p103 = por %p101, %p102
    %p104 = scmp.ne.s32.totalorder %s90, %s91
    %p105 = scmp.eq.s32.totalorder %s15, 1
    %p106 = por %p104, %p105
    %p108 = scmp.ne.s32.totalorder %s91, %s107
    %p109 = scmp.eq.s32.totalorder %s15, 0
    %p110 = por %p108, %p109
    %p111 = scmp.le.s32.totalorder 1, %s9
    %p112 = scmp.lt.s32.totalorder %s9, 3
    %p113 = pnand %p111, %p112
    %p114 = pneg %p113
    // Predicated region
    $region9: #{down3d_forward.3} parent=5 // pred_check
      _
    $region10: #{down3d_forward.3} parent=5 // pred_check_branch
      %116 = sbr.rel (%p113) target = $region12
    $region11: #{down3d_forward.3} parent=5 // pred_region
      %s117 = ssub.s32 %s9, 1
      // Predicated region
      $region13: #{down3d_forward.3} parent=11 // pred_check
        %p118 = pneg %p56
      $region14: #{down3d_forward.3} parent=11 // pred_check_branch
        %120 = sbr.rel (%p118) target = $region16
      $region15: #{down3d_forward.3} parent=11 // pred_region
        _
      $region16: #{down3d_forward.3} parent=11 // pred_fallthru
        _
      // Predicated region
      $region17: #{down3d_forward.3} parent=11 // pred_check
        %p121 = pneg %p77
      $region18: #{down3d_forward.3} parent=11 // pred_check_branch
        %123 = sbr.rel (%p121) target = $region20
      $region19: #{down3d_forward.3} parent=11 // pred_region
        _
      $region20: #{down3d_forward.3} parent=11 // pred_fallthru
        _
    $region12: #{down3d_forward.3} parent=5 // pred_fallthru
      _
    %p124 = scmp.lt.s32.totalorder %s9, 2
    // Predicated region
    $region21: #{down3d_forward.3} parent=5 // pred_check
      %p125 = pneg %p124
    $region22: #{down3d_forward.3} parent=5 // pred_check_branch
      %127 = sbr.rel (%p125) target = $region24
    $region23: #{down3d_forward.3} parent=5 // pred_region
      // Predicated region
      $region25: #{down3d_forward.3} parent=23 // pred_check
        %p128 = pneg %p29
      $region26: #{down3d_forward.3} parent=23 // pred_check_branch
        %130 = sbr.rel (%p128) target = $region28
      $region27: #{down3d_forward.3} parent=23 // pred_region
        %p131 = scmp.lt.s32.totalorder %s9, 1
        %s132 = scalar_select %p131, %s9, 1
        %s133 = smul.addr %s132, 8
        %s134 = smul.addr %s133, 4
        %s135 = scalar_lea.vmem %s0, %s134
      $region28: #{down3d_forward.3} parent=23 // pred_fallthru
        _
    $region24: #{down3d_forward.3} parent=5 // pred_fallthru
      _
    %p136 = scmp.le.s32.totalorder 1, %s9
    %p137 = scmp.lt.s32.totalorder %s9, 3
    %p138 = pnand %p136, %p137
    %p139 = pneg %p138
    // Predicated region
    $region29: #{down3d_forward.3} parent=5 // pred_check
      _
    $region30: #{down3d_forward.3} parent=5 // pred_check_branch
      %141 = sbr.rel (%p138) target = $region32
    $region31: #{down3d_forward.3} parent=5 // pred_region
      %s142 = ssub.s32 %s9, 1
      %p143 = scmp.lt.s32.totalorder %s14, 1
      %s144 = scalar_select %p143, %s14, 1
      %s145 = smul.addr %s144, 8
      %s146 = smul.addr %s145, 4
      %s147 = scalar_lea.vmem %s0, %s146
      %p148 = pneg %p35
      %p149 = pneg %p32
      %p150 = pneg %p56
      %p151 = pneg %p53
      %p152 = pneg %p77
      %p153 = pneg %p74
      %p154 = pneg %p103
      %p155 = pneg %p100
      %p156 = scmp.lt.s32.totalorder %s14, 1
      %s157 = scalar_select %p156, %s14, 1
      %s158 = smul.addr %s157, 4
      %s159 = scalar_lea.vmem %s3, %s158
      %p160 = scmp.lt.s32.totalorder %s14, 1
      %s161 = scalar_select %p160, %s14, 1
      %s162 = smul.addr %s161, 8
      %s163 = smul.addr %s162, 4
      %s164 = scalar_lea.vmem %s0, %s163
      %p165 = scmp.lt.s32.totalorder %s14, 1
      %s166 = scalar_select %p165, %s14, 1
      %s167 = smul.addr %s166, 4
      %s168 = scalar_lea.vmem %s3, %s167
      %v169 = vld [vmem:[%s164] sm:$0xf]
      %s170 = scalar_lea.vmem %s164, 4
      %v171 = vld [vmem:[%s170] sm:$0xf]
      %v172 = vmax.f32 %v169, %v171
      %s173 = scalar_lea.vmem %s164, 8
      %v174 = vld [vmem:[%s173] sm:$0xf]
      %v175 = vmax.f32 %v172, %v174
      %s176 = scalar_lea.vmem %s164, 12
      %v177 = vld [vmem:[%s176] sm:$0xf]
      %v178 = vmax.f32 %v175, %v177
      %s179 = scalar_lea.vmem %s164, 16
      %v180 = vld [vmem:[%s179] sm:$0xf]
      %v181 = vmax.f32 %v178, %v180
      %s182 = scalar_lea.vmem %s164, 20
      %v183 = vld [vmem:[%s182] sm:$0xf]
      %v184 = vmax.f32 %v181, %v183
      %s185 = scalar_lea.vmem %s164, 24
      %v186 = vld [vmem:[%s185] sm:$0xf]
      %v187 = vmax.f32 %v184, %v186
      %s188 = scalar_lea.vmem %s164, 28
      %v189 = vld [vmem:[%s188] sm:$0xf]
      %v190 = vmax.f32 %v187, %v189
      %vm191 = vcmask 516096
      %192 = vst.msk [vmem:[#allocation2] sm:$0x1] %vm191, 0.0
      %193 = vst.msk [vmem:[#allocation2 + $0x5] sm:$0x1] %vm191, 0.0
      %vm194 = vcmask 519168
      %195 = vst.msk [vmem:[#allocation2 + $0x1] sm:$0xf] %vm194, %v190
      %v196 = vld [vmem:[#allocation2] sm:$0xf]
      %v197 = vld [vmem:[%s1] sm:$0xff]
      %v198 = vld [vmem:[%s1 + $0x8] sm:$0xff]
      %v199 = vld [vmem:[%s1 + $0x10] sm:$0xff]
      %v200 = vld [vmem:[%s1 + $0x18] sm:$0xff]
      %v201 = vld [vmem:[%s1 + $0x20] sm:$0xff]
      %v202 = vld [vmem:[%s1 + $0x28] sm:$0xff]
      %v203 = vld [vmem:[%s1 + $0x30] sm:$0xff]
      %v204 = vld [vmem:[%s1 + $0x38] sm:$0xff]
      %v205 = vld [vmem:[#allocation2 + $0x1] sm:$0xf]
      %s206 = scalar_lea.vmem %s1, 64
      %v207 = vld [vmem:[%s206] sm:$0xff]
      %v208 = vld [vmem:[%s206 + $0x8] sm:$0xff]
      %v209 = vld [vmem:[%s206 + $0x10] sm:$0xff]
      %v210 = vld [vmem:[%s206 + $0x18] sm:$0xff]
      %v211 = vld [vmem:[%s206 + $0x20] sm:$0xff]
      %v212 = vld [vmem:[%s206 + $0x28] sm:$0xff]
      %v213 = vld [vmem:[%s206 + $0x30] sm:$0xff]
      %v214 = vld [vmem:[%s206 + $0x38] sm:$0xff]
      %vm215 = vcmask 523264
      %v217 = vsel %vm215, %v205, 0
      %219 = vmatprep.subr.mxu0 0.0
      %220 = vmatpush1.msra.mxu0 0.0
      %221 = vmatprep.subr.mxu0 0.0
      %222 = vmatpush1.msra.mxu0 0.0
      %223 = vmatprep.subr.mxu0 0.0
      %224 = vmatpush1.msra.mxu0 0.0
      %225 = vmatprep.subr.mxu0 0.0
      %226 = vmatpush1.msra.mxu0 0.0
      %227 = vmatprep.subr.mxu0 0.0
      %228 = vmatpush1.msra.mxu0 0.0
      %229 = vmatprep.subr.mxu0 0.0
      %230 = vmatpush1.msra.mxu0 0.0
      %231 = vmatprep.subr.mxu0 0.0
      %232 = vmatpush1.msra.mxu0 0.0
      %233 = vmatprep.subr.mxu0 0.0
      %234 = vmatpush1.msra.mxu0 0.0
      %235 = vmatprep.subr.mxu0 0.0
      %236 = vmatpush1.msra.mxu0 %v214
      %237 = vmatprep.subr.mxu0 0.0
      %238 = vmatpush1.msra.mxu0 %v213
      %239 = vmatprep.subr.mxu0 0.0
      %240 = vmatpush1.msra.mxu0 %v212
      %241 = vmatprep.subr.mxu0 0.0
      %242 = vmatpush1.msra.mxu0 %v211
      %243 = vmatprep.subr.mxu0 0.0
      %244 = vmatpush1.msra.mxu0 %v210
      %245 = vmatprep.subr.mxu0 0.0
      %246 = vmatpush1.msra.mxu0 %v209
      %247 = vmatprep.subr.mxu0 0.0
      %248 = vmatpush1.msra.mxu0 %v208
      %249 = vmatprep.subr.mxu0 0.0
      %250 = vmatpush1.msra.mxu0 %v207
      %251 = vmatprep.subr.mxu0 0.0
      %252 = vmatpush2.msra.mxu0 0.0
      %253 = vmatprep.subr.mxu0 0.0
      %254 = vmatpush2.msra.mxu0 0.0
      %255 = vmatprep.subr.mxu0 0.0
      %256 = vmatpush2.msra.mxu0 0.0
      %257 = vmatprep.subr.mxu0 0.0
      %258 = vmatpush2.msra.mxu0 0.0
      %259 = vmatprep.subr.mxu0 0.0
      %260 = vmatpush2.msra.mxu0 0.0
      %261 = vmatprep.subr.mxu0 0.0
      %262 = vmatpush2.msra.mxu0 0.0
      %263 = vmatprep.subr.mxu0 0.0
      %264 = vmatpush2.msra.mxu0 0.0
      %265 = vmatprep.subr.mxu0 0.0
      %266 = vmatpush2.msra.mxu0 0.0
      %267 = vmatprep.subr.mxu0 0.0
      %268 = vmatpush2.msra.mxu0 0.0
      %269 = vmatprep.subr.mxu0 0.0
      %270 = vmatpush2.msra.mxu0 0.0
      %271 = vmatprep.subr.mxu0 0.0
      %272 = vmatpush2.msra.mxu0 0.0
      %273 = vmatprep.subr.mxu0 0.0
      %274 = vmatpush2.msra.mxu0 0.0
      %275 = vmatprep.subr.mxu0 0.0
      %276 = vmatpush2.msra.mxu0 0.0
      %277 = vmatprep.subr.mxu0 0.0
      %278 = vmatpush2.msra.mxu0 0.0
      %279 = vmatprep.subr.mxu0 0.0
      %280 = vmatpush2.msra.mxu0 0.0
      %281 = vmatprep.subr.mxu0 0.0
      %282 = vmatpush2.msra.mxu0 0.0
      %283 = vmatprep.mubr.f32.mxu0 0.0
      %284 = vmatmul.mubr.f32.gmra.mxu0 %v217
      %v285 = vpop.f32.mrf.mxu0
      %v286 = vadd.f32 0.0, %v285
      %v287 = vpop.f32.mrf.mxu0
      %288 = vdwg.mxu0
      %v290 = vsel %vm215, %v196, 0
      %292 = vmatprep.subr.mxu0 0.0
      %293 = vmatpush1.msra.mxu0 0.0
      %294 = vmatprep.subr.mxu0 0.0
      %295 = vmatpush1.msra.mxu0 0.0
      %296 = vmatprep.subr.mxu0 0.0
      %297 = vmatpush1.msra.mxu0 0.0
      %298 = vmatprep.subr.mxu0 0.0
      %299 = vmatpush1.msra.mxu0 0.0
      %300 = vmatprep.subr.mxu0 0.0
      %301 = vmatpush1.msra.mxu0 0.0
      %302 = vmatprep.subr.mxu0 0.0
      %303 = vmatpush1.msra.mxu0 0.0
      %304 = vmatprep.subr.mxu0 0.0
      %305 = vmatpush1.msra.mxu0 0.0
      %306 = vmatprep.subr.mxu0 0.0
      %307 = vmatpush1.msra.mxu0 0.0
      %308 = vmatprep.subr.mxu0 0.0
      %309 = vmatpush1.msra.mxu0 %v204
      %310 = vmatprep.subr.mxu0 0.0
      %311 = vmatpush1.msra.mxu0 %v203
      %312 = vmatprep.subr.mxu0 0.0
      %313 = vmatpush1.msra.mxu0 %v202
      %314 = vmatprep.subr.mxu0 0.0
      %315 = vmatpush1.msra.mxu0 %v201
      %316 = vmatprep.subr.mxu0 0.0
      %317 = vmatpush1.msra.mxu0 %v200
      %318 = vmatprep.subr.mxu0 0.0
      %319 = vmatpush1.msra.mxu0 %v199
      %320 = vmatprep.subr.mxu0 0.0
      %321 = vmatpush1.msra.mxu0 %v198
      %322 = vmatprep.subr.mxu0 0.0
      %323 = vmatpush1.msra.mxu0 %v197
      %324 = vmatprep.subr.mxu0 0.0
      %325 = vmatpush2.msra.mxu0 0.0
      %326 = vmatprep.subr.mxu0 0.0
      %327 = vmatpush2.msra.mxu0 0.0
      %328 = vmatprep.subr.mxu0 0.0
      %329 = vmatpush2.msra.mxu0 0.0
      %330 = vmatprep.subr.mxu0 0.0
      %331 = vmatpush2.msra.mxu0 0.0
      %332 = vmatprep.subr.mxu0 0.0
      %333 = vmatpush2.msra.mxu0 0.0
      %334 = vmatprep.subr.mxu0 0.0
      %335 = vmatpush2.msra.mxu0 0.0
      %336 = vmatprep.subr.mxu0 0.0
      %337 = vmatpush2.msra.mxu0 0.0
      %338 = vmatprep.subr.mxu0 0.0
      %339 = vmatpush2.msra.mxu0 0.0
      %340 = vmatprep.subr.mxu0 0.0
      %341 = vmatpush2.msra.mxu0 0.0
      %342 = vmatprep.subr.mxu0 0.0
      %343 = vmatpush2.msra.mxu0 0.0
      %344 = vmatprep.subr.mxu0 0.0
      %345 = vmatpush2.msra.mxu0 0.0
      %346 = vmatprep.subr.mxu0 0.0
      %347 = vmatpush2.msra.mxu0 0.0
      %348 = vmatprep.subr.mxu0 0.0
      %349 = vmatpush2.msra.mxu0 0.0
      %350 = vmatprep.subr.mxu0 0.0
      %351 = vmatpush2.msra.mxu0 0.0
      %352 = vmatprep.subr.mxu0 0.0
      %353 = vmatpush2.msra.mxu0 0.0
      %354 = vmatprep.subr.mxu0 0.0
      %355 = vmatpush2.msra.mxu0 0.0
      %356 = vmatprep.mubr.f32.mxu0 0.0
      %357 = vmatmul.mubr.f32.gmra.mxu0 %v290
      %v358 = vpop.f32.mrf.mxu0
      %v359 = vadd.f32 %v286, %v358
      %v360 = vpop.f32.mrf.mxu0
      %361 = vdwg.mxu0
      %v362 = vld [vmem:[#allocation2 + $0x2] sm:$0xf]
      %s363 = scalar_lea.vmem %s1, 128
      %v364 = vld [vmem:[%s363] sm:$0xff]
      %v365 = vld [vmem:[%s363 + $0x8] sm:$0xff]
      %v366 = vld [vmem:[%s363 + $0x10] sm:$0xff]
      %v367 = vld [vmem:[%s363 + $0x18] sm:$0xff]
      %v368 = vld [vmem:[%s363 + $0x20] sm:$0xff]
      %v369 = vld [vmem:[%s363 + $0x28] sm:$0xff]
      %v370 = vld [vmem:[%s363 + $0x30] sm:$0xff]
      %v371 = vld [vmem:[%s363 + $0x38] sm:$0xff]
      %v373 = vsel %vm215, %v362, 0
      %375 = vmatprep.subr.mxu0 0.0
      %376 = vmatpush1.msra.mxu0 0.0
      %377 = vmatprep.subr.mxu0 0.0
      %378 = vmatpush1.msra.mxu0 0.0
      %379 = vmatprep.subr.mxu0 0.0
      %380 = vmatpush1.msra.mxu0 0.0
      %381 = vmatprep.subr.mxu0 0.0
      %382 = vmatpush1.msra.mxu0 0.0
      %383 = vmatprep.subr.mxu0 0.0
      %384 = vmatpush1.msra.mxu0 0.0
      %385 = vmatprep.subr.mxu0 0.0
      %386 = vmatpush1.msra.mxu0 0.0
      %387 = vmatprep.subr.mxu0 0.0
      %388 = vmatpush1.msra.mxu0 0.0
      %389 = vmatprep.subr.mxu0 0.0
      %390 = vmatpush1.msra.mxu0 0.0
      %391 = vmatprep.subr.mxu0 0.0
      %392 = vmatpush1.msra.mxu0 %v371
      %393 = vmatprep.subr.mxu0 0.0
      %394 = vmatpush1.msra.mxu0 %v370
      %395 = vmatprep.subr.mxu0 0.0
      %396 = vmatpush1.msra.mxu0 %v369
      %397 = vmatprep.subr.mxu0 0.0
      %398 = vmatpush1.msra.mxu0 %v368
      %399 = vmatprep.subr.mxu0 0.0
      %400 = vmatpush1.msra.mxu0 %v367
      %401 = vmatprep.subr.mxu0 0.0
      %402 = vmatpush1.msra.mxu0 %v366
      %403 = vmatprep.subr.mxu0 0.0
      %404 = vmatpush1.msra.mxu0 %v365
      %405 = vmatprep.subr.mxu0 0.0
      %406 = vmatpush1.msra.mxu0 %v364
      %407 = vmatprep.subr.mxu0 0.0
      %408 = vmatpush2.msra.mxu0 0.0
      %409 = vmatprep.subr.mxu0 0.0
      %410 = vmatpush2.msra.mxu0 0.0
      %411 = vmatprep.subr.mxu0 0.0
      %412 = vmatpush2.msra.mxu0 0.0
      %413 = vmatprep.subr.mxu0 0.0
      %414 = vmatpush2.msra.mxu0 0.0
      %415 = vmatprep.subr.mxu0 0.0
      %416 = vmatpush2.msra.mxu0 0.0
      %417 = vmatprep.subr.mxu0 0.0
      %418 = vmatpush2.msra.mxu0 0.0
      %419 = vmatprep.subr.mxu0 0.0
      %420 = vmatpush2.msra.mxu0 0.0
      %421 = vmatprep.subr.mxu0 0.0
      %422 = vmatpush2.msra.mxu0 0.0
      %423 = vmatprep.subr.mxu0 0.0
      %424 = vmatpush2.msra.mxu0 0.0
      %425 = vmatprep.subr.mxu0 0.0
      %426 = vmatpush2.msra.mxu0 0.0
      %427 = vmatprep.subr.mxu0 0.0
      %428 = vmatpush2.msra.mxu0 0.0
      %429 = vmatprep.subr.mxu0 0.0
      %430 = vmatpush2.msra.mxu0 0.0
      %431 = vmatprep.subr.mxu0 0.0
      %432 = vmatpush2.msra.mxu0 0.0
      %433 = vmatprep.subr.mxu0 0.0
      %434 = vmatpush2.msra.mxu0 0.0
      %435 = vmatprep.subr.mxu0 0.0
      %436 = vmatpush2.msra.mxu0 0.0
      %437 = vmatprep.subr.mxu0 0.0
      %438 = vmatpush2.msra.mxu0 0.0
      %439 = vmatprep.mubr.f32.mxu0 0.0
      %440 = vmatmul.mubr.f32.gmra.mxu0 %v373
      %v441 = vpop.f32.mrf.mxu0
      %v442 = vadd.f32 0.0, %v441
      %v443 = vpop.f32.mrf.mxu0
      %444 = vdwg.mxu0
      %v445 = vadd.f32 %v359, %v442
      %v446 = vld [vmem:[%s2] sm:$0x1]
      %v448 = vlaneseq
      %v449 = vshrl.u32 %v448, 7
      %v450 = vsub.s32 0, %v449
      %v451 = vrot.slane %v446, %v450
      %v453 = vadd.f32 %v445, %v451
      %454 = vst [vmem:[%s168] sm:$0xf] %v453
      %p455 = scmp.lt.s32.totalorder %s14, 1
      %s456 = scalar_select %p455, %s14, 1
      %s457 = smul.addr %s456, 4
      %s458 = scalar_lea.vmem %s3, %s457
      // Predicated region
      $region33: #{down3d_forward.3} parent=31 // pred_check
        %p459 = pneg %p100
      $region34: #{down3d_forward.3} parent=31 // pred_check_branch
        %461 = sbr.rel (%p459) target = $region36
      $region35: #{down3d_forward.3} parent=31 // pred_region
        _
      $region36: #{down3d_forward.3} parent=31 // pred_fallthru
        _
    $region32: #{down3d_forward.3} parent=5 // pred_fallthru
      _
    %p462 = scmp.le.s32.totalorder 2, %s9
    // Predicated region
    $region37: #{down3d_forward.3} parent=5 // pred_check
      %p463 = pneg %p462
    $region38: #{down3d_forward.3} parent=5 // pred_check_branch
      %465 = sbr.rel (%p463) target = $region40
    $region39: #{down3d_forward.3} parent=5 // pred_region
      %s466 = ssub.s32 %s9, 2
      // Predicated region
      $region41: #{down3d_forward.3} parent=39 // pred_check
        %p467 = pneg %p106
      $region42: #{down3d_forward.3} parent=39 // pred_check_branch
        %469 = sbr.rel (%p467) target = $region44
      $region43: #{down3d_forward.3} parent=39 // pred_region
        %p470 = scmp.lt.s32.totalorder %s15, 1
        %s471 = scalar_select %p470, %s15, 1
        %s472 = smul.addr %s471, 4
        %s473 = scalar_lea.vmem %s3, %s472
      $region44: #{down3d_forward.3} parent=39 // pred_fallthru
        _
    $region40: #{down3d_forward.3} parent=5 // pred_fallthru
      _
  $region6: #{down3d_forward.3} parent=0 // loop_footer
    %s13 = sadd.s32 1, %s9
  $region7: #{down3d_forward.3} parent=0 // loop_footer_branch
    %8 = sbr.rel target = $region3
  $region8: #{down3d_forward.3} parent=0 // loop_exit
    _

// kernel: down3d_forward.4
$region0: #{down3d_forward.4}
  #allocation0 [shape = 'u32[]', space=smem, size = 0x4, offset = 0x4, fixed_abs, tag = 'smem constant byte address 0x4 - core index']
  #allocation1 [shape = 'u32[144,128]{1,0:T(1,128)}', space=vmem, size = 0x12000, scoped, tag = 'internal scratch']
  #allocation2 [shape = 'f32[6,128]{1,0:T(8,128)}', space=vmem, size = 0x1000, scoped, tag = 'scratch operand']
  %s0 = inlined_call_operand.vmem [shape: f32[2,4,128], index: 0, kind: input, shape index: {}]
  %s1 = inlined_call_operand.vmem [shape: f32[1,128], index: 1, kind: input, shape index: {}]
  %s2 = inlined_call_operand.vmem [shape: f32[1,128], index: 2, kind: input, shape index: {}]
  %s3 = inlined_call_operand.vmem [shape: f32[3,128,128], index: 3, kind: input, shape index: {}]
  %s4 = inlined_call_operand.vmem [shape: f32[1,128], index: 4, kind: input, shape index: {}]
  %s5 = inlined_call_operand.vmem [shape: f32[2,4,128], index: 5, kind: output, shape index: {}]
  %s6 = sld [smem:[#allocation0]]
  $region53: #{down3d_forward.4} parent=0
    _
  %s8 = ssub.s32 1, %s6
  %s9 = scalar_select 0, %s8, %s6
  loop: start=0, step=1, limit=4
  $region2: #{down3d_forward.4} parent=0 // loop_pre_header
    _
  $region3: #{down3d_forward.4} parent=0 // loop_header
    %s11 = sphi 0, %s15
    %p12 = scmp.ge.s32.totalorder %s11, 4
    %s21 = sphi 0, %s23
    %s24 = sphi 0, %s21
    %s25 = sphi 0, %s24
    %s41 = sphi 0, %s25
    %s45 = sphi 0, %s45
    %s47 = sphi 0, %s45
    %s48 = sphi 0, %s47
    %s62 = sphi 0, %s48
    %s66 = sphi 0, %s66
    %s68 = sphi 0, %s66
    %s69 = sphi 0, %s68
    %s83 = sphi 0, %s69
    %s87 = sphi 0, %s87
    %s89 = sphi 0, %s87
    %s90 = sphi 0, %s89
    %s104 = sphi 0, %s90
    %s108 = sphi 0, %s108
    %s110 = sphi 0, %s108
    %s111 = sphi 0, %s110
    %s125 = sphi 0, %s111
    %s131 = sphi 0, %s133
    %s134 = sphi 0, %s131
    %s135 = sphi 0, %s134
    %s151 = sphi 0, %s135
  $region4: #{down3d_forward.4} parent=0 // loop_header_branch
    %14 = sbr.rel (%p12) target = $region8
  $region5: #{down3d_forward.4} parent=0 // loop_body
    %s16 = ssub.s32 %s11, 1
    %s17 = ssub.s32 %s11, 2
    %s18 = sadd.s32 %s11, 1
    %s19 = ssub.s32 %s11, %s18
    %p20 = scmp.eq.s32.totalorder %s19, 0
    %s22 = sadd.s32 %s21, 1
    %s23 = scalar_select %p20, %s21, %s22
    %p26 = pneg %p20
    %p27 = scmp.eq.s32.totalorder %s11, 1
    %p28 = por %p26, %p27
    %p29 = scmp.ne.s32.totalorder %s21, %s24
    %p30 = scmp.eq.s32.totalorder %s11, 0
    %p31 = por %p29, %p30
    %p32 = scmp.ne.s32.totalorder %s21, %s24
    %p33 = scmp.eq.s32.totalorder %s16, 1
    %p34 = por %p32, %p33
    %p35 = scmp.ne.s32.totalorder %s24, %s25
    %p36 = scmp.eq.s32.totalorder %s16, 0
    %p37 = por %p35, %p36
    %p38 = scmp.ne.s32.totalorder %s24, %s25
    %p39 = scmp.eq.s32.totalorder %s17, 1
    %p40 = por %p38, %p39
    %p42 = scmp.ne.s32.totalorder %s25, %s41
    %p43 = scmp.eq.s32.totalorder %s17, 0
    %p44 = por %p42, %p43
    %s46 = sadd.s32 %s45, 1
    %p49 = scmp.eq.s32.totalorder %s11, 1
    %p50 = scmp.ne.s32.totalorder %s45, %s47
    %p51 = scmp.eq.s32.totalorder %s11, 0
    %p52 = por %p50, %p51
    %p53 = scmp.ne.s32.totalorder %s45, %s47
    %p54 = scmp.eq.s32.totalorder %s16, 1
    %p55 = por %p53, %p54
    %p56 = scmp.ne.s32.totalorder %s47, %s48
    %p57 = scmp.eq.s32.totalorder %s16, 0
    %p58 = por %p56, %p57
    %p59 = scmp.ne.s32.totalorder %s47, %s48
    %p60 = scmp.eq.s32.totalorder %s17, 1
    %p61 = por %p59, %p60
    %p63 = scmp.ne.s32.totalorder %s48, %s62
    %p64 = scmp.eq.s32.totalorder %s17, 0
    %p65 = por %p63, %p64
    %s67 = sadd.s32 %s66, 1
    %p70 = scmp.eq.s32.totalorder %s11, 1
    %p71 = scmp.ne.s32.totalorder %s66, %s68
    %p72 = scmp.eq.s32.totalorder %s11, 0
    %p73 = por %p71, %p72
    %p74 = scmp.ne.s32.totalorder %s66, %s68
    %p75 = scmp.eq.s32.totalorder %s16, 1
    %p76 = por %p74, %p75
    %p77 = scmp.ne.s32.totalorder %s68, %s69
    %p78 = scmp.eq.s32.totalorder %s16, 0
    %p79 = por %p77, %p78
    %p80 = scmp.ne.s32.totalorder %s68, %s69
    %p81 = scmp.eq.s32.totalorder %s17, 1
    %p82 = por %p80, %p81
    %p84 = scmp.ne.s32.totalorder %s69, %s83
    %p85 = scmp.eq.s32.totalorder %s17, 0
    %p86 = por %p84, %p85
    %s88 = sadd.s32 %s87, 1
    %p91 = scmp.eq.s32.totalorder %s11, 1
    %p92 = scmp.ne.s32.totalorder %s87, %s89
    %p93 = scmp.eq.s32.totalorder %s11, 0
    %p94 = por %p92, %p93
    %p95 = scmp.ne.s32.totalorder %s87, %s89
    %p96 = scmp.eq.s32.totalorder %s16, 1
    %p97 = por %p95, %p96
    %p98 = scmp.ne.s32.totalorder %s89, %s90
    %p99 = scmp.eq.s32.totalorder %s16, 0
    %p100 = por %p98, %p99
    %p101 = scmp.ne.s32.totalorder %s89, %s90
    %p102 = scmp.eq.s32.totalorder %s17, 1
    %p103 = por %p101, %p102
    %p105 = scmp.ne.s32.totalorder %s90, %s104
    %p106 = scmp.eq.s32.totalorder %s17, 0
    %p107 = por %p105, %p106
    %s109 = sadd.s32 %s108, 1
    %p112 = scmp.eq.s32.totalorder %s11, 1
    %p113 = scmp.ne.s32.totalorder %s108, %s110
    %p114 = scmp.eq.s32.totalorder %s11, 0
    %p115 = por %p113, %p114
    %p116 = scmp.ne.s32.totalorder %s108, %s110
    %p117 = scmp.eq.s32.totalorder %s16, 1
    %p118 = por %p116, %p117
    %p119 = scmp.ne.s32.totalorder %s110, %s111
    %p120 = scmp.eq.s32.totalorder %s16, 0
    %p121 = por %p119, %p120
    %p122 = scmp.ne.s32.totalorder %s110, %s111
    %p123 = scmp.eq.s32.totalorder %s17, 1
    %p124 = por %p122, %p123
    %p126 = scmp.ne.s32.totalorder %s111, %s125
    %p127 = scmp.eq.s32.totalorder %s17, 0
    %p128 = por %p126, %p127
    %s129 = ssub.s32 %s11, %s18
    %p130 = scmp.eq.s32.totalorder %s129, 0
    %s132 = sadd.s32 %s131, 1
    %s133 = scalar_select %p130, %s131, %s132
    %p136 = pneg %p130
    %p137 = scmp.eq.s32.totalorder %s11, 1
    %p138 = por %p136, %p137
    %p139 = scmp.ne.s32.totalorder %s131, %s134
    %p140 = scmp.eq.s32.totalorder %s11, 0
    %p141 = por %p139, %p140
    %p142 = scmp.ne.s32.totalorder %s131, %s134
    %p143 = scmp.eq.s32.totalorder %s16, 1
    %p144 = por %p142, %p143
    %p145 = scmp.ne.s32.totalorder %s134, %s135
    %p146 = scmp.eq.s32.totalorder %s16, 0
    %p147 = por %p145, %p146
    %p148 = scmp.ne.s32.totalorder %s134, %s135
    %p149 = scmp.eq.s32.totalorder %s17, 1
    %p150 = por %p148, %p149
    %p152 = scmp.ne.s32.totalorder %s135, %s151
    %p153 = scmp.eq.s32.totalorder %s17, 0
    %p154 = por %p152, %p153
    %p155 = scmp.le.s32.totalorder 1, %s11
    %p156 = scmp.lt.s32.totalorder %s11, 3
    %p157 = pnand %p155, %p156
    %p158 = pneg %p157
    // Predicated region
    $region9: #{down3d_forward.4} parent=5 // pred_check
      _
    $region10: #{down3d_forward.4} parent=5 // pred_check_branch
      %160 = sbr.rel (%p157) target = $region12
    $region11: #{down3d_forward.4} parent=5 // pred_region
      %s161 = ssub.s32 %s11, 1
      // Predicated region
      $region13: #{down3d_forward.4} parent=11 // pred_check
        %p162 = pneg %p58
      $region14: #{down3d_forward.4} parent=11 // pred_check_branch
        %164 = sbr.rel (%p162) target = $region16
      $region15: #{down3d_forward.4} parent=11 // pred_region
        _
      $region16: #{down3d_forward.4} parent=11 // pred_fallthru
        _
      // Predicated region
      $region17: #{down3d_forward.4} parent=11 // pred_check
        %p165 = pneg %p79
      $region18: #{down3d_forward.4} parent=11 // pred_check_branch
        %167 = sbr.rel (%p165) target = $region20
      $region19: #{down3d_forward.4} parent=11 // pred_region
        _
      $region20: #{down3d_forward.4} parent=11 // pred_fallthru
        _
      // Predicated region
      $region21: #{down3d_forward.4} parent=11 // pred_check
        %p168 = pneg %p100
      $region22: #{down3d_forward.4} parent=11 // pred_check_branch
        %170 = sbr.rel (%p168) target = $region24
      $region23: #{down3d_forward.4} parent=11 // pred_region
        _
      $region24: #{down3d_forward.4} parent=11 // pred_fallthru
        _
      // Predicated region
      $region25: #{down3d_forward.4} parent=11 // pred_check
        %p171 = pneg %p121
      $region26: #{down3d_forward.4} parent=11 // pred_check_branch
        %173 = sbr.rel (%p171) target = $region28
      $region27: #{down3d_forward.4} parent=11 // pred_region
        _
      $region28: #{down3d_forward.4} parent=11 // pred_fallthru
        _
    $region12: #{down3d_forward.4} parent=5 // pred_fallthru
      _
    %p174 = scmp.lt.s32.totalorder %s11, 2
    // Predicated region
    $region29: #{down3d_forward.4} parent=5 // pred_check
      %p175 = pneg %p174
    $region30: #{down3d_forward.4} parent=5 // pred_check_branch
      %177 = sbr.rel (%p175) target = $region32
    $region31: #{down3d_forward.4} parent=5 // pred_region
      // Predicated region
      $region33: #{down3d_forward.4} parent=31 // pred_check
        %p178 = pneg %p31
      $region34: #{down3d_forward.4} parent=31 // pred_check_branch
        %180 = sbr.rel (%p178) target = $region36
      $region35: #{down3d_forward.4} parent=31 // pred_region
        %p181 = scmp.lt.s32.totalorder %s11, 1
        %s182 = scalar_select %p181, %s11, 1
        %s183 = smul.addr %s182, 4
        %s184 = scalar_lea.vmem %s0, %s183
      $region36: #{down3d_forward.4} parent=31 // pred_fallthru
        _
    $region32: #{down3d_forward.4} parent=5 // pred_fallthru
      _
    %p185 = scmp.le.s32.totalorder 1, %s11
    %p186 = scmp.lt.s32.totalorder %s11, 3
    %p187 = pnand %p185, %p186
    %p188 = pneg %p187
    // Predicated region
    $region37: #{down3d_forward.4} parent=5 // pred_check
      _
    $region38: #{down3d_forward.4} parent=5 // pred_check_branch
      %190 = sbr.rel (%p187) target = $region40
    $region39: #{down3d_forward.4} parent=5 // pred_region
      %s191 = ssub.s32 %s11, 1
      %p192 = scmp.lt.s32.totalorder %s16, 1
      %s193 = scalar_select %p192, %s16, 1
      %s194 = smul.addr %s193, 4
      %s195 = scalar_lea.vmem %s0, %s194
      %p196 = pneg %p37
      %p197 = pneg %p34
      %p198 = pneg %p58
      %p199 = pneg %p55
      %p200 = pneg %p79
      %p201 = pneg %p76
      %p202 = pneg %p100
      %p203 = pneg %p97
      %p204 = pneg %p121
      %p205 = pneg %p118
      %p206 = pneg %p147
      %p207 = pneg %p144
      %p208 = scmp.lt.s32.totalorder %s16, 1
      %s209 = scalar_select %p208, %s16, 1
      %s210 = smul.addr %s209, 4
      %s211 = scalar_lea.vmem %s5, %s210
      %p212 = scmp.lt.s32.totalorder %s16, 1
      %s213 = scalar_select %p212, %s16, 1
      %s214 = smul.addr %s213, 4
      %s215 = scalar_lea.vmem %s0, %s214
      %p216 = scmp.lt.s32.totalorder %s16, 1
      %s217 = scalar_select %p216, %s16, 1
      %s218 = smul.addr %s217, 4
      %s219 = scalar_lea.vmem %s5, %s218
      %v220 = vld [vmem:[%s215] sm:$0xf]
      %v221 = vld [vmem:[%s1] sm:$0x1]
      %v223 = vlaneseq
      %v224 = vshrl.u32 %v223, 7
      %v225 = vsub.s32 0, %v224
      %v226 = vrot.slane %v221, %v225
      %v228 = vmul.f32 %v220, %v226
      %v229 = vld [vmem:[%s2] sm:$0x1]
      %v231 = vlaneseq
      %v232 = vshrl.u32 %v231, 7
      %v233 = vsub.s32 0, %v232
      %v234 = vrot.slane %v229, %v233
      %v236 = vadd.f32 %v228, %v234
      %v237 = vmax.f32 %v236, 0.0
      %238 = vst [vmem:[#allocation2] sm:$0x1] 0.0
      %239 = vst [vmem:[#allocation2 + $0x5] sm:$0x1] 0.0
      %240 = vst [vmem:[#allocation2 + $0x1] sm:$0xf] %v237
      %v241 = vld [vmem:[#allocation2] sm:$0xf]
      %v242 = vld [vmem:[%s3] sm:$0xff]
      %v243 = vld [vmem:[%s3 + $0x8] sm:$0xff]
      %v244 = vld [vmem:[%s3 + $0x10] sm:$0xff]
      %v245 = vld [vmem:[%s3 + $0x18] sm:$0xff]
      %v246 = vld [vmem:[%s3 + $0x20] sm:$0xff]
      %v247 = vld [vmem:[%s3 + $0x28] sm:$0xff]
      %v248 = vld [vmem:[%s3 + $0x30] sm:$0xff]
      %v249 = vld [vmem:[%s3 + $0x38] sm:$0xff]
      %v250 = vld [vmem:[%s3 + $0x40] sm:$0xff]
      %v251 = vld [vmem:[%s3 + $0x48] sm:$0xff]
      %v252 = vld [vmem:[%s3 + $0x50] sm:$0xff]
      %v253 = vld [vmem:[%s3 + $0x58] sm:$0xff]
      %v254 = vld [vmem:[%s3 + $0x60] sm:$0xff]
      %v255 = vld [vmem:[%s3 + $0x68] sm:$0xff]
      %v256 = vld [vmem:[%s3 + $0x70] sm:$0xff]
      %v257 = vld [vmem:[%s3 + $0x78] sm:$0xff]
      %v258 = vld [vmem:[#allocation2 + $0x1] sm:$0xf]
      %s259 = scalar_lea.vmem %s3, 128
      %v260 = vld [vmem:[%s259] sm:$0xff]
      %v261 = vld [vmem:[%s259 + $0x8] sm:$0xff]
      %v262 = vld [vmem:[%s259 + $0x10] sm:$0xff]
      %v263 = vld [vmem:[%s259 + $0x18] sm:$0xff]
      %v264 = vld [vmem:[%s259 + $0x20] sm:$0xff]
      %v265 = vld [vmem:[%s259 + $0x28] sm:$0xff]
      %v266 = vld [vmem:[%s259 + $0x30] sm:$0xff]
      %v267 = vld [vmem:[%s259 + $0x38] sm:$0xff]
      %v268 = vld [vmem:[%s259 + $0x40] sm:$0xff]
      %v269 = vld [vmem:[%s259 + $0x48] sm:$0xff]
      %v270 = vld [vmem:[%s259 + $0x50] sm:$0xff]
      %v271 = vld [vmem:[%s259 + $0x58] sm:$0xff]
      %v272 = vld [vmem:[%s259 + $0x60] sm:$0xff]
      %v273 = vld [vmem:[%s259 + $0x68] sm:$0xff]
      %v274 = vld [vmem:[%s259 + $0x70] sm:$0xff]
      %v275 = vld [vmem:[%s259 + $0x78] sm:$0xff]
      %276 = vmatprep.subr.mxu0 0.0
      %277 = vmatpush1.msra.mxu0 %v275
      %278 = vmatprep.subr.mxu0 0.0
      %279 = vmatpush1.msra.mxu0 %v274
      %280 = vmatprep.subr.mxu0 0.0
      %281 = vmatpush1.msra.mxu0 %v273
      %282 = vmatprep.subr.mxu0 0.0
      %283 = vmatpush1.msra.mxu0 %v272
      %284 = vmatprep.subr.mxu0 0.0
      %285 = vmatpush1.msra.mxu0 %v271
      %286 = vmatprep.subr.mxu0 0.0
      %287 = vmatpush1.msra.mxu0 %v270
      %288 = vmatprep.subr.mxu0 0.0
      %289 = vmatpush1.msra.mxu0 %v269
      %290 = vmatprep.subr.mxu0 0.0
      %291 = vmatpush1.msra.mxu0 %v268
      %292 = vmatprep.subr.mxu0 0.0
      %293 = vmatpush1.msra.mxu0 %v267
      %294 = vmatprep.subr.mxu0 0.0
      %295 = vmatpush1.msra.mxu0 %v266
      %296 = vmatprep.subr.mxu0 0.0
      %297 = vmatpush1.msra.mxu0 %v265
      %298 = vmatprep.subr.mxu0 0.0
      %299 = vmatpush1.msra.mxu0 %v264
      %300 = vmatprep.subr.mxu0 0.0
      %301 = vmatpush1.msra.mxu0 %v263
      %302 = vmatprep.subr.mxu0 0.0
      %303 = vmatpush1.msra.mxu0 %v262
      %304 = vmatprep.subr.mxu0 0.0
      %305 = vmatpush1.msra.mxu0 %v261
      %306 = vmatprep.subr.mxu0 0.0
      %307 = vmatpush1.msra.mxu0 %v260
      %308 = vmatprep.subr.mxu0 0.0
      %309 = vmatpush2.msra.mxu0 0.0
      %310 = vmatprep.subr.mxu0 0.0
      %311 = vmatpush2.msra.mxu0 0.0
      %312 = vmatprep.subr.mxu0 0.0
      %313 = vmatpush2.msra.mxu0 0.0
      %314 = vmatprep.subr.mxu0 0.0
      %315 = vmatpush2.msra.mxu0 0.0
      %316 = vmatprep.subr.mxu0 0.0
      %317 = vmatpush2.msra.mxu0 0.0
      %318 = vmatprep.subr.mxu0 0.0
      %319 = vmatpush2.msra.mxu0 0.0
      %320 = vmatprep.subr.mxu0 0.0
      %321 = vmatpush2.msra.mxu0 0.0
      %322 = vmatprep.subr.mxu0 0.0
      %323 = vmatpush2.msra.mxu0 0.0
      %324 = vmatprep.subr.mxu0 0.0
      %325 = vmatpush2.msra.mxu0 0.0
      %326 = vmatprep.subr.mxu0 0.0
      %327 = vmatpush2.msra.mxu0 0.0
      %328 = vmatprep.subr.mxu0 0.0
      %329 = vmatpush2.msra.mxu0 0.0
      %330 = vmatprep.subr.mxu0 0.0
      %331 = vmatpush2.msra.mxu0 0.0
      %332 = vmatprep.subr.mxu0 0.0
      %333 = vmatpush2.msra.mxu0 0.0
      %334 = vmatprep.subr.mxu0 0.0
      %335 = vmatpush2.msra.mxu0 0.0
      %336 = vmatprep.subr.mxu0 0.0
      %337 = vmatpush2.msra.mxu0 0.0
      %338 = vmatprep.subr.mxu0 0.0
      %339 = vmatpush2.msra.mxu0 0.0
      %340 = vmatprep.mubr.f32.mxu0 0.0
      %341 = vmatmul.mubr.f32.gmra.mxu0 %v258
      %v342 = vpop.f32.mrf.mxu0
      %v343 = vadd.f32 0.0, %v342
      %v344 = vpop.f32.mrf.mxu0
      %345 = vdwg.mxu0
      %346 = vmatprep.subr.mxu0 0.0
      %347 = vmatpush1.msra.mxu0 %v257
      %348 = vmatprep.subr.mxu0 0.0
      %349 = vmatpush1.msra.mxu0 %v256
      %350 = vmatprep.subr.mxu0 0.0
      %351 = vmatpush1.msra.mxu0 %v255
      %352 = vmatprep.subr.mxu0 0.0
      %353 = vmatpush1.msra.mxu0 %v254
      %354 = vmatprep.subr.mxu0 0.0
      %355 = vmatpush1.msra.mxu0 %v253
      %356 = vmatprep.subr.mxu0 0.0
      %357 = vmatpush1.msra.mxu0 %v252
      %358 = vmatprep.subr.mxu0 0.0
      %359 = vmatpush1.msra.mxu0 %v251
      %360 = vmatprep.subr.mxu0 0.0
      %361 = vmatpush1.msra.mxu0 %v250
      %362 = vmatprep.subr.mxu0 0.0
      %363 = vmatpush1.msra.mxu0 %v249
      %364 = vmatprep.subr.mxu0 0.0
      %365 = vmatpush1.msra.mxu0 %v248
      %366 = vmatprep.subr.mxu0 0.0
      %367 = vmatpush1.msra.mxu0 %v247
      %368 = vmatprep.subr.mxu0 0.0
      %369 = vmatpush1.msra.mxu0 %v246
      %370 = vmatprep.subr.mxu0 0.0
      %371 = vmatpush1.msra.mxu0 %v245
      %372 = vmatprep.subr.mxu0 0.0
      %373 = vmatpush1.msra.mxu0 %v244
      %374 = vmatprep.subr.mxu0 0.0
      %375 = vmatpush1.msra.mxu0 %v243
      %376 = vmatprep.subr.mxu0 0.0
      %377 = vmatpush1.msra.mxu0 %v242
      %378 = vmatprep.subr.mxu0 0.0
      %379 = vmatpush2.msra.mxu0 0.0
      %380 = vmatprep.subr.mxu0 0.0
      %381 = vmatpush2.msra.mxu0 0.0
      %382 = vmatprep.subr.mxu0 0.0
      %383 = vmatpush2.msra.mxu0 0.0
      %384 = vmatprep.subr.mxu0 0.0
      %385 = vmatpush2.msra.mxu0 0.0
      %386 = vmatprep.subr.mxu0 0.0
      %387 = vmatpush2.msra.mxu0 0.0
      %388 = vmatprep.subr.mxu0 0.0
      %389 = vmatpush2.msra.mxu0 0.0
      %390 = vmatprep.subr.mxu0 0.0
      %391 = vmatpush2.msra.mxu0 0.0
      %392 = vmatprep.subr.mxu0 0.0
      %393 = vmatpush2.msra.mxu0 0.0
      %394 = vmatprep.subr.mxu0 0.0
      %395 = vmatpush2.msra.mxu0 0.0
      %396 = vmatprep.subr.mxu0 0.0
      %397 = vmatpush2.msra.mxu0 0.0
      %398 = vmatprep.subr.mxu0 0.0
      %399 = vmatpush2.msra.mxu0 0.0
      %400 = vmatprep.subr.mxu0 0.0
      %401 = vmatpush2.msra.mxu0 0.0
      %402 = vmatprep.subr.mxu0 0.0
      %403 = vmatpush2.msra.mxu0 0.0
      %404 = vmatprep.subr.mxu0 0.0
      %405 = vmatpush2.msra.mxu0 0.0
      %406 = vmatprep.subr.mxu0 0.0
      %407 = vmatpush2.msra.mxu0 0.0
      %408 = vmatprep.subr.mxu0 0.0
      %409 = vmatpush2.msra.mxu0 0.0
      %410 = vmatprep.mubr.f32.mxu0 0.0
      %411 = vmatmul.mubr.f32.gmra.mxu0 %v241
      %v412 = vpop.f32.mrf.mxu0
      %v413 = vadd.f32 %v343, %v412
      %v414 = vpop.f32.mrf.mxu0
      %415 = vdwg.mxu0
      %v416 = vld [vmem:[#allocation2 + $0x2] sm:$0xf]
      %s417 = scalar_lea.vmem %s3, 256
      %v418 = vld [vmem:[%s417] sm:$0xff]
      %v419 = vld [vmem:[%s417 + $0x8] sm:$0xff]
      %v420 = vld [vmem:[%s417 + $0x10] sm:$0xff]
      %v421 = vld [vmem:[%s417 + $0x18] sm:$0xff]
      %v422 = vld [vmem:[%s417 + $0x20] sm:$0xff]
      %v423 = vld [vmem:[%s417 + $0x28] sm:$0xff]
      %v424 = vld [vmem:[%s417 + $0x30] sm:$0xff]
      %v425 = vld [vmem:[%s417 + $0x38] sm:$0xff]
      %v426 = vld [vmem:[%s417 + $0x40] sm:$0xff]
      %v427 = vld [vmem:[%s417 + $0x48] sm:$0xff]
      %v428 = vld [vmem:[%s417 + $0x50] sm:$0xff]
      %v429 = vld [vmem:[%s417 + $0x58] sm:$0xff]
      %v430 = vld [vmem:[%s417 + $0x60] sm:$0xff]
      %v431 = vld [vmem:[%s417 + $0x68] sm:$0xff]
      %v432 = vld [vmem:[%s417 + $0x70] sm:$0xff]
      %v433 = vld [vmem:[%s417 + $0x78] sm:$0xff]
      %434 = vmatprep.subr.mxu0 0.0
      %435 = vmatpush1.msra.mxu0 %v433
      %436 = vmatprep.subr.mxu0 0.0
      %437 = vmatpush1.msra.mxu0 %v432
      %438 = vmatprep.subr.mxu0 0.0
      %439 = vmatpush1.msra.mxu0 %v431
      %440 = vmatprep.subr.mxu0 0.0
      %441 = vmatpush1.msra.mxu0 %v430
      %442 = vmatprep.subr.mxu0 0.0
      %443 = vmatpush1.msra.mxu0 %v429
      %444 = vmatprep.subr.mxu0 0.0
      %445 = vmatpush1.msra.mxu0 %v428
      %446 = vmatprep.subr.mxu0 0.0
      %447 = vmatpush1.msra.mxu0 %v427
      %448 = vmatprep.subr.mxu0 0.0
      %449 = vmatpush1.msra.mxu0 %v426
      %450 = vmatprep.subr.mxu0 0.0
      %451 = vmatpush1.msra.mxu0 %v425
      %452 = vmatprep.subr.mxu0 0.0
      %453 = vmatpush1.msra.mxu0 %v424
      %454 = vmatprep.subr.mxu0 0.0
      %455 = vmatpush1.msra.mxu0 %v423
      %456 = vmatprep.subr.mxu0 0.0
      %457 = vmatpush1.msra.mxu0 %v422
      %458 = vmatprep.subr.mxu0 0.0
      %459 = vmatpush1.msra.mxu0 %v421
      %460 = vmatprep.subr.mxu0 0.0
      %461 = vmatpush1.msra.mxu0 %v420
      %462 = vmatprep.subr.mxu0 0.0
      %463 = vmatpush1.msra.mxu0 %v419
      %464 = vmatprep.subr.mxu0 0.0
      %465 = vmatpush1.msra.mxu0 %v418
      %466 = vmatprep.subr.mxu0 0.0
      %467 = vmatpush2.msra.mxu0 0.0
      %468 = vmatprep.subr.mxu0 0.0
      %469 = vmatpush2.msra.mxu0 0.0
      %470 = vmatprep.subr.mxu0 0.0
      %471 = vmatpush2.msra.mxu0 0.0
      %472 = vmatprep.subr.mxu0 0.0
      %473 = vmatpush2.msra.mxu0 0.0
      %474 = vmatprep.subr.mxu0 0.0
      %475 = vmatpush2.msra.mxu0 0.0
      %476 = vmatprep.subr.mxu0 0.0
      %477 = vmatpush2.msra.mxu0 0.0
      %478 = vmatprep.subr.mxu0 0.0
      %479 = vmatpush2.msra.mxu0 0.0
      %480 = vmatprep.subr.mxu0 0.0
      %481 = vmatpush2.msra.mxu0 0.0
      %482 = vmatprep.subr.mxu0 0.0
      %483 = vmatpush2.msra.mxu0 0.0
      %484 = vmatprep.subr.mxu0 0.0
      %485 = vmatpush2.msra.mxu0 0.0
      %486 = vmatprep.subr.mxu0 0.0
      %487 = vmatpush2.msra.mxu0 0.0
      %488 = vmatprep.subr.mxu0 0.0
      %489 = vmatpush2.msra.mxu0 0.0
      %490 = vmatprep.subr.mxu0 0.0
      %491 = vmatpush2.msra.mxu0 0.0
      %492 = vmatprep.subr.mxu0 0.0
      %493 = vmatpush2.msra.mxu0 0.0
      %494 = vmatprep.subr.mxu0 0.0
      %495 = vmatpush2.msra.mxu0 0.0
      %496 = vmatprep.subr.mxu0 0.0
      %497 = vmatpush2.msra.mxu0 0.0
      %498 = vmatprep.mubr.f32.mxu0 0.0
      %499 = vmatmul.mubr.f32.gmra.mxu0 %v416
      %v500 = vpop.f32.mrf.mxu0
      %v501 = vadd.f32 0.0, %v500
      %v502 = vpop.f32.mrf.mxu0
      %503 = vdwg.mxu0
      %v504 = vadd.f32 %v413, %v501
      %v505 = vld [vmem:[%s4] sm:$0x1]
      %v507 = vlaneseq
      %v508 = vshrl.u32 %v507, 7
      %v509 = vsub.s32 0, %v508
      %v510 = vrot.slane %v505, %v509
      %v512 = vadd.f32 %v504, %v510
      %513 = vst [vmem:[%s219] sm:$0xf] %v512
      %p514 = scmp.lt.s32.totalorder %s16, 1
      %s515 = scalar_select %p514, %s16, 1
      %s516 = smul.addr %s515, 4
      %s517 = scalar_lea.vmem %s5, %s516
      // Predicated region
      $region41: #{down3d_forward.4} parent=39 // pred_check
        %p518 = pneg %p144
      $region42: #{down3d_forward.4} parent=39 // pred_check_branch
        %520 = sbr.rel (%p518) target = $region44
      $region43: #{down3d_forward.4} parent=39 // pred_region
        _
      $region44: #{down3d_forward.4} parent=39 // pred_fallthru
        _
    $region40: #{down3d_forward.4} parent=5 // pred_fallthru
      _
    %p521 = scmp.le.s32.totalorder 2, %s11
    // Predicated region
    $region45: #{down3d_forward.4} parent=5 // pred_check
      %p522 = pneg %p521
    $region46: #{down3d_forward.4} parent=5 // pred_check_branch
      %524 = sbr.rel (%p522) target = $region48
    $region47: #{down3d_forward.4} parent=5 // pred_region
      %s525 = ssub.s32 %s11, 2
      // Predicated region
      $region49: #{down3d_forward.4} parent=47 // pred_check
        %p526 = pneg %p150
      $region50: #{down3d_forward.4} parent=47 // pred_check_branch
        %528 = sbr.rel (%p526) target = $region52
      $region51: #{down3d_forward.4} parent=47 // pred_region
        %p529 = scmp.lt.s32.totalorder %s17, 1
        %s530 = scalar_select %p529, %s17, 1
        %s531 = smul.addr %s530, 4
        %s532 = scalar_lea.vmem %s5, %s531
      $region52: #{down3d_forward.4} parent=47 // pred_fallthru
        _
    $region48: #{down3d_forward.4} parent=5 // pred_fallthru
      _
  $region6: #{down3d_forward.4} parent=0 // loop_footer
    %s15 = sadd.s32 1, %s11
  $region7: #{down3d_forward.4} parent=0 // loop_footer_branch
    %10 = sbr.rel target = $region3
  $region8: #{down3d_forward.4} parent=0 // loop_exit
    _

// kernel: down3d_forward.5
$region0: #{down3d_forward.5}
  #allocation0 [shape = 'u32[]', space=smem, size = 0x4, offset = 0x4, fixed_abs, tag = 'smem constant byte address 0x4 - core index']
  #allocation1 [shape = 'u32[144,128]{1,0:T(1,128)}', space=vmem, size = 0x12000, scoped, tag = 'internal scratch']
  %s0 = inlined_call_operand.vmem [shape: f32[2,4,128], index: 0, kind: input, shape index: {}]
  %s1 = inlined_call_operand.vmem [shape: f32[1,128], index: 1, kind: input, shape index: {}]
  %s2 = inlined_call_operand.vmem [shape: f32[1,128], index: 2, kind: input, shape index: {}]
  %s3 = inlined_call_operand.vmem [shape: f32[2,4,128], index: 3, kind: output, shape index: {}]
  %s4 = sld [smem:[#allocation0]]
  $region45: #{down3d_forward.5} parent=0
    _
  %s6 = ssub.s32 1, %s4
  %s7 = scalar_select 0, %s6, %s4
  loop: start=0, step=1, limit=4
  $region2: #{down3d_forward.5} parent=0 // loop_pre_header
    _
  $region3: #{down3d_forward.5} parent=0 // loop_header
    %s9 = sphi 0, %s13
    %p10 = scmp.ge.s32.totalorder %s9, 4
    %s19 = sphi 0, %s21
    %s22 = sphi 0, %s19
    %s23 = sphi 0, %s22
    %s39 = sphi 0, %s23
    %s43 = sphi 0, %s43
    %s45 = sphi 0, %s43
    %s46 = sphi 0, %s45
    %s60 = sphi 0, %s46
    %s64 = sphi 0, %s64
    %s66 = sphi 0, %s64
    %s67 = sphi 0, %s66
    %s81 = sphi 0, %s67
    %s87 = sphi 0, %s89
    %s90 = sphi 0, %s87
    %s91 = sphi 0, %s90
    %s107 = sphi 0, %s91
  $region4: #{down3d_forward.5} parent=0 // loop_header_branch
    %12 = sbr.rel (%p10) target = $region8
  $region5: #{down3d_forward.5} parent=0 // loop_body
    %s14 = ssub.s32 %s9, 1
    %s15 = ssub.s32 %s9, 2
    %s16 = sadd.s32 %s9, 1
    %s17 = ssub.s32 %s9, %s16
    %p18 = scmp.eq.s32.totalorder %s17, 0
    %s20 = sadd.s32 %s19, 1
    %s21 = scalar_select %p18, %s19, %s20
    %p24 = pneg %p18
    %p25 = scmp.eq.s32.totalorder %s9, 1
    %p26 = por %p24, %p25
    %p27 = scmp.ne.s32.totalorder %s19, %s22
    %p28 = scmp.eq.s32.totalorder %s9, 0
    %p29 = por %p27, %p28
    %p30 = scmp.ne.s32.totalorder %s19, %s22
    %p31 = scmp.eq.s32.totalorder %s14, 1
    %p32 = por %p30, %p31
    %p33 = scmp.ne.s32.totalorder %s22, %s23
    %p34 = scmp.eq.s32.totalorder %s14, 0
    %p35 = por %p33, %p34
    %p36 = scmp.ne.s32.totalorder %s22, %s23
    %p37 = scmp.eq.s32.totalorder %s15, 1
    %p38 = por %p36, %p37
    %p40 = scmp.ne.s32.totalorder %s23, %s39
    %p41 = scmp.eq.s32.totalorder %s15, 0
    %p42 = por %p40, %p41
    %s44 = sadd.s32 %s43, 1
    %p47 = scmp.eq.s32.totalorder %s9, 1
    %p48 = scmp.ne.s32.totalorder %s43, %s45
    %p49 = scmp.eq.s32.totalorder %s9, 0
    %p50 = por %p48, %p49
    %p51 = scmp.ne.s32.totalorder %s43, %s45
    %p52 = scmp.eq.s32.totalorder %s14, 1
    %p53 = por %p51, %p52
    %p54 = scmp.ne.s32.totalorder %s45, %s46
    %p55 = scmp.eq.s32.totalorder %s14, 0
    %p56 = por %p54, %p55
    %p57 = scmp.ne.s32.totalorder %s45, %s46
    %p58 = scmp.eq.s32.totalorder %s15, 1
    %p59 = por %p57, %p58
    %p61 = scmp.ne.s32.totalorder %s46, %s60
    %p62 = scmp.eq.s32.totalorder %s15, 0
    %p63 = por %p61, %p62
    %s65 = sadd.s32 %s64, 1
    %p68 = scmp.eq.s32.totalorder %s9, 1
    %p69 = scmp.ne.s32.totalorder %s64, %s66
    %p70 = scmp.eq.s32.totalorder %s9, 0
    %p71 = por %p69, %p70
    %p72 = scmp.ne.s32.totalorder %s64, %s66
    %p73 = scmp.eq.s32.totalorder %s14, 1
    %p74 = por %p72, %p73
    %p75 = scmp.ne.s32.totalorder %s66, %s67
    %p76 = scmp.eq.s32.totalorder %s14, 0
    %p77 = por %p75, %p76
    %p78 = scmp.ne.s32.totalorder %s66, %s67
    %p79 = scmp.eq.s32.totalorder %s15, 1
    %p80 = por %p78, %p79
    %p82 = scmp.ne.s32.totalorder %s67, %s81
    %p83 = scmp.eq.s32.totalorder %s15, 0
    %p84 = por %p82, %p83
    %s85 = ssub.s32 %s9, %s16
    %p86 = scmp.eq.s32.totalorder %s85, 0
    %s88 = sadd.s32 %s87, 1
    %s89 = scalar_select %p86, %s87, %s88
    %p92 = pneg %p86
    %p93 = scmp.eq.s32.totalorder %s9, 1
    %p94 = por %p92, %p93
    %p95 = scmp.ne.s32.totalorder %s87, %s90
    %p96 = scmp.eq.s32.totalorder %s9, 0
    %p97 = por %p95, %p96
    %p98 = scmp.ne.s32.totalorder %s87, %s90
    %p99 = scmp.eq.s32.totalorder %s14, 1
    %p100 = por %p98, %p99
    %p101 = scmp.ne.s32.totalorder %s90, %s91
    %p102 = scmp.eq.s32.totalorder %s14, 0
    %p103 = por %p101, %p102
    %p104 = scmp.ne.s32.totalorder %s90, %s91
    %p105 = scmp.eq.s32.totalorder %s15, 1
    %p106 = por %p104, %p105
    %p108 = scmp.ne.s32.totalorder %s91, %s107
    %p109 = scmp.eq.s32.totalorder %s15, 0
    %p110 = por %p108, %p109
    %p111 = scmp.le.s32.totalorder 1, %s9
    %p112 = scmp.lt.s32.totalorder %s9, 3
    %p113 = pnand %p111, %p112
    %p114 = pneg %p113
    // Predicated region
    $region9: #{down3d_forward.5} parent=5 // pred_check
      _
    $region10: #{down3d_forward.5} parent=5 // pred_check_branch
      %116 = sbr.rel (%p113) target = $region12
    $region11: #{down3d_forward.5} parent=5 // pred_region
      %s117 = ssub.s32 %s9, 1
      // Predicated region
      $region13: #{down3d_forward.5} parent=11 // pred_check
        %p118 = pneg %p56
      $region14: #{down3d_forward.5} parent=11 // pred_check_branch
        %120 = sbr.rel (%p118) target = $region16
      $region15: #{down3d_forward.5} parent=11 // pred_region
        _
      $region16: #{down3d_forward.5} parent=11 // pred_fallthru
        _
      // Predicated region
      $region17: #{down3d_forward.5} parent=11 // pred_check
        %p121 = pneg %p77
      $region18: #{down3d_forward.5} parent=11 // pred_check_branch
        %123 = sbr.rel (%p121) target = $region20
      $region19: #{down3d_forward.5} parent=11 // pred_region
        _
      $region20: #{down3d_forward.5} parent=11 // pred_fallthru
        _
    $region12: #{down3d_forward.5} parent=5 // pred_fallthru
      _
    %p124 = scmp.lt.s32.totalorder %s9, 2
    // Predicated region
    $region21: #{down3d_forward.5} parent=5 // pred_check
      %p125 = pneg %p124
    $region22: #{down3d_forward.5} parent=5 // pred_check_branch
      %127 = sbr.rel (%p125) target = $region24
    $region23: #{down3d_forward.5} parent=5 // pred_region
      // Predicated region
      $region25: #{down3d_forward.5} parent=23 // pred_check
        %p128 = pneg %p29
      $region26: #{down3d_forward.5} parent=23 // pred_check_branch
        %130 = sbr.rel (%p128) target = $region28
      $region27: #{down3d_forward.5} parent=23 // pred_region
        %p131 = scmp.lt.s32.totalorder %s9, 1
        %s132 = scalar_select %p131, %s9, 1
        %s133 = smul.addr %s132, 4
        %s134 = scalar_lea.vmem %s0, %s133
      $region28: #{down3d_forward.5} parent=23 // pred_fallthru
        _
    $region24: #{down3d_forward.5} parent=5 // pred_fallthru
      _
    %p135 = scmp.le.s32.totalorder 1, %s9
    %p136 = scmp.lt.s32.totalorder %s9, 3
    %p137 = pnand %p135, %p136
    %p138 = pneg %p137
    // Predicated region
    $region29: #{down3d_forward.5} parent=5 // pred_check
      _
    $region30: #{down3d_forward.5} parent=5 // pred_check_branch
      %140 = sbr.rel (%p137) target = $region32
    $region31: #{down3d_forward.5} parent=5 // pred_region
      %s141 = ssub.s32 %s9, 1
      %p142 = scmp.lt.s32.totalorder %s14, 1
      %s143 = scalar_select %p142, %s14, 1
      %s144 = smul.addr %s143, 4
      %s145 = scalar_lea.vmem %s0, %s144
      %p146 = pneg %p35
      %p147 = pneg %p32
      %p148 = pneg %p56
      %p149 = pneg %p53
      %p150 = pneg %p77
      %p151 = pneg %p74
      %p152 = pneg %p103
      %p153 = pneg %p100
      %p154 = scmp.lt.s32.totalorder %s14, 1
      %s155 = scalar_select %p154, %s14, 1
      %s156 = smul.addr %s155, 4
      %s157 = scalar_lea.vmem %s3, %s156
      %p158 = scmp.lt.s32.totalorder %s14, 1
      %s159 = scalar_select %p158, %s14, 1
      %s160 = smul.addr %s159, 4
      %s161 = scalar_lea.vmem %s0, %s160
      %p162 = scmp.lt.s32.totalorder %s14, 1
      %s163 = scalar_select %p162, %s14, 1
      %s164 = smul.addr %s163, 4
      %s165 = scalar_lea.vmem %s3, %s164
      %v166 = vld [vmem:[%s161] sm:$0xf]
      %v167 = vld [vmem:[%s1] sm:$0x1]
      %v169 = vlaneseq
      %v170 = vshrl.u32 %v169, 7
      %v171 = vsub.s32 0, %v170
      %v172 = vrot.slane %v167, %v171
      %v174 = vmul.f32 %v166, %v172
      %v175 = vld [vmem:[%s2] sm:$0x1]
      %v177 = vlaneseq
      %v178 = vshrl.u32 %v177, 7
      %v179 = vsub.s32 0, %v178
      %v180 = vrot.slane %v175, %v179
      %v182 = vadd.f32 %v174, %v180
      %v183 = vmax.f32 %v182, 0.0
      %184 = vst [vmem:[%s165] sm:$0xf] %v183
      %p185 = scmp.lt.s32.totalorder %s14, 1
      %s186 = scalar_select %p185, %s14, 1
      %s187 = smul.addr %s186, 4
      %s188 = scalar_lea.vmem %s3, %s187
      // Predicated region
      $region33: #{down3d_forward.5} parent=31 // pred_check
        %p189 = pneg %p100
      $region34: #{down3d_forward.5} parent=31 // pred_check_branch
        %191 = sbr.rel (%p189) target = $region36
      $region35: #{down3d_forward.5} parent=31 // pred_region
        _
      $region36: #{down3d_forward.5} parent=31 // pred_fallthru
        _
    $region32: #{down3d_forward.5} parent=5 // pred_fallthru
      _
    %p192 = scmp.le.s32.totalorder 2, %s9
    // Predicated region
    $region37: #{down3d_forward.5} parent=5 // pred_check
      %p193 = pneg %p192
    $region38: #{down3d_forward.5} parent=5 // pred_check_branch
      %195 = sbr.rel (%p193) target = $region40
    $region39: #{down3d_forward.5} parent=5 // pred_region
      %s196 = ssub.s32 %s9, 2
      // Predicated region
      $region41: #{down3d_forward.5} parent=39 // pred_check
        %p197 = pneg %p106
      $region42: #{down3d_forward.5} parent=39 // pred_check_branch
        %199 = sbr.rel (%p197) target = $region44
      $region43: #{down3d_forward.5} parent=39 // pred_region
        %p200 = scmp.lt.s32.totalorder %s15, 1
        %s201 = scalar_select %p200, %s15, 1
        %s202 = smul.addr %s201, 4
        %s203 = scalar_lea.vmem %s3, %s202
      $region44: #{down3d_forward.5} parent=39 // pred_fallthru
        _
    $region40: #{down3d_forward.5} parent=5 // pred_fallthru
      _
  $region6: #{down3d_forward.5} parent=0 // loop_footer
    %s13 = sadd.s32 1, %s9
  $region7: #{down3d_forward.5} parent=0 // loop_footer_branch
    %8 = sbr.rel target = $region3
  $region8: #{down3d_forward.5} parent=0 // loop_exit
    _

</llo_original>
